<compile_context>
chip_gen: v5e
topology: v5e:2x2
jax: 0.10.0
libtpu: 0.0.40
codegen_flags: <defaults>
</compile_context>

<pallas_src>
import jax
import jax.numpy as jnp
import numpy as np
from jax import lax
from jax.experimental import pallas as pl
from jax.experimental.pallas import tpu as pltpu

NEG_BIG = jnp.float32(-1e30)   # mask value for padded logit lanes (f32 only)


# ---------------------------------------------------------------------------
# Kernel factory: one grid step == one chunk of Tc timesteps.
# ---------------------------------------------------------------------------
def make_rnn_chunk_kernel(T_total):
    def rnn_chunk_kernel(xs_ref, h0_ref,
                         w1x_ref, w1h_ref, b1_ref, w2_ref, b2_ref,
                         out_ref, h_out_ref,
                         h_state, prex_buf, relu_buf):
        c = pl.program_id(0)
        Tc, B_pad, I_pad = xs_ref.shape
        N1 = w1x_ref.shape[1]            # I_pad + H_pad (fused [out1 | h_new])

        # Load the initial hidden state into the persistent scratch at chunk 0.
        @pl.when(c == 0)
        def _():
            h_state[...] = h0_ref[...]

        # ---- Hoisted x-side matmul for the whole chunk (fills the MXU once).
        x_flat = xs_ref[...].reshape(Tc * B_pad, I_pad)
        prex_buf[...] = (jnp.dot(x_flat, w1x_ref[...],
                                 preferred_element_type=jnp.float32)
                         + b1_ref[...])

        w1h = w1h_ref[...]               # (H_pad, N1), VMEM-resident

        # ---- Serial recurrence: only the tiny h-dot + relu is on the chain.
        def step(t, h):
            r = pl.multiple_of(t * B_pad, B_pad)
            pre = prex_buf[pl.ds(r, B_pad), :] + jnp.dot(
                h, w1h, preferred_element_type=jnp.float32)
            act = jnp.maximum(pre, 0.0)          # (B_pad, N1) = [out1 | h_new]
            relu_buf[pl.ds(r, B_pad), :] = act   # buffer for bulk stage 2
            h_new = act[:, I_pad:]               # (B_pad, H_pad), pads stay 0
            valid = (c * Tc + t) < T_total       # mask trailing padded steps
            return jnp.where(valid, h_new, h)

        h_final = lax.fori_loop(0, Tc, step, h_state[...], unroll=True)
        h_state[...] = h_final

        # ---- Bulk Stage 2 + log_softmax for the whole chunk (off serial path).
        logits = (jnp.dot(relu_buf[...], w2_ref[...],
                          preferred_element_type=jnp.float32)
                  + b2_ref[...])                 # padded lanes hold ~ -1e30
        # dropout(p=0.1): eval-mode identity (deterministic forward).
        m = jnp.max(logits, axis=-1, keepdims=True)
        lse = m + jnp.log(jnp.sum(jnp.exp(logits - m), axis=-1, keepdims=True))
        out_ref[...] = (logits - lse).reshape(Tc, B_pad, I_pad)

        # ---- Final hidden written exactly once.
        @pl.when(c == pl.num_programs(0) - 1)
        def _():
            h_out_ref[...] = h_final

    return rnn_chunk_kernel


# ---------------------------------------------------------------------------
# Host-side weight packing: split + pad + fuse the three Linear layers.
#   stage 1:  pre    = x @ W1x + h @ W1h + b1   -> layout [out1 | h_new]
#   stage 2:  logits = relu(pre) @ W2 + b2       (rows ordered to match pre)
# ---------------------------------------------------------------------------
def pack_params(params, I, H, I_pad, H_pad):
    (wih_x, wih_h, bih, wio_x, wio_h, bio, woo_h, woo_o, boo) = params
    N1 = I_pad + H_pad

    w1x = jnp.zeros((I_pad, N1), jnp.float32)
    w1x = w1x.at[:I, :I].set(wio_x)                      # -> out1 lanes
    w1x = w1x.at[:I, I_pad:I_pad + H].set(wih_x)         # -> h_new lanes

    w1h = jnp.zeros((H_pad, N1), jnp.float32)
    w1h = w1h.at[:H, :I].set(wio_h)
    w1h = w1h.at[:H, I_pad:I_pad + H].set(wih_h)

    b1 = jnp.zeros((1, N1), jnp.float32)
    b1 = b1.at[:, :I].set(bio)
    b1 = b1.at[:, I_pad:I_pad + H].set(bih)

    # o2o input is cat([hidden_new, out1]); in the packed pre layout that is
    # rows [I_pad, I_pad+H) (h_new) and rows [0, I) (out1).
    w2 = jnp.zeros((N1, I_pad), jnp.float32)
    w2 = w2.at[:I, :I].set(woo_o)                        # out1 rows
    w2 = w2.at[I_pad:I_pad + H, :I].set(woo_h)           # h_new rows

    # padded logit lanes get a huge negative bias so softmax ignores them (f32).
    b2 = jnp.full((1, I_pad), NEG_BIG, jnp.float32).at[:, :I].set(boo)

    return w1x, w1h, b1, w2, b2


# ---------------------------------------------------------------------------
# Wrapper: run all T timesteps in one pallas_call, Tc timesteps per grid step.
# ---------------------------------------------------------------------------
def rnn_sequence_forward(xs, h0, params, *, chunk=64):
    """xs: (T, B, I) one-hot chars, h0: (B, H).
    Returns (log_probs (T, B, I), h_T (B, H))."""
    T, B, I = xs.shape
    H = h0.shape[1]
    B_pad = -(-B // 8) * 8            # full sublanes
    I_pad = -(-I // 128) * 128        # lane-dense feature dim
    H_pad = -(-H // 128) * 128        # lane-dense hidden dim
    Tc = max(1, min(chunk, T))        # chunk keeps VMEM well under 32 MiB
    n_chunks = -(-T // Tc)
    T_pad = n_chunks * Tc
    N1 = I_pad + H_pad

    w1x, w1h, b1, w2, b2 = pack_params(params, I, H, I_pad, H_pad)

    xs_p = jnp.zeros((T_pad, B_pad, I_pad), jnp.float32).at[:T, :B, :I].set(xs)
    h0_p = jnp.zeros((B_pad, H_pad), jnp.float32).at[:B, :H].set(h0)

    const2 = lambda c: (0, 0)

    grid_spec = pltpu.PrefetchScalarGridSpec(
        num_scalar_prefetch=0,
        grid=(n_chunks,),
        in_specs=[
            pl.BlockSpec((Tc, B_pad, I_pad), lambda c: (c, 0, 0)),  # chunk of x
            pl.BlockSpec((B_pad, H_pad), const2),                   # h0
            pl.BlockSpec(w1x.shape, const2),                        # weights:
            pl.BlockSpec(w1h.shape, const2),                        #   constant
            pl.BlockSpec(b1.shape, const2),                         #   index_map
            pl.BlockSpec(w2.shape, const2),                         #   => DMA'd
            pl.BlockSpec(b2.shape, const2),                         #   once
        ],
        out_specs=(
            pl.BlockSpec((Tc, B_pad, I_pad), lambda c: (c, 0, 0)),  # log-probs
            pl.BlockSpec((B_pad, H_pad), const2),                   # final hidden
        ),
        scratch_shapes=[
            pltpu.VMEM((B_pad, H_pad), jnp.float32),        # carried hidden
            pltpu.VMEM((Tc * B_pad, N1), jnp.float32),      # hoisted pre_x
            pltpu.VMEM((Tc * B_pad, N1), jnp.float32),      # relu(pre) buffer
        ],
    )

    out_p, h_out_p = pl.pallas_call(
        make_rnn_chunk_kernel(T),
        out_shape=(jax.ShapeDtypeStruct((T_pad, B_pad, I_pad), jnp.float32),
                   jax.ShapeDtypeStruct((B_pad, H_pad), jnp.float32)),
        grid_spec=grid_spec,
        compiler_params=pltpu.CompilerParams(
            dimension_semantics=("arbitrary",)),   # sequential: state carry
    )(xs_p, h0_p, w1x, w1h, b1, w2, b2)

    return out_p[:T, :B, :I], h_out_p[:B, :H]


# ---------------------------------------------------------------------------
# Parameter init (same layout/semantics as the PyTorch module) and references.
# ---------------------------------------------------------------------------
def init_params(key, input_size, hidden_size):
    """Weights kept as (in_features, out_features), pre-split at the concat boundary."""
    ks = jax.random.split(key, 6)
    scale = 0.1
    I, H = input_size, hidden_size

    w_i2h = scale * jax.random.normal(ks[0], (I + H, H), jnp.float32)
    b_i2h = scale * jax.random.normal(ks[1], (1, H), jnp.float32)
    w_i2o = scale * jax.random.normal(ks[2], (I + H, I), jnp.float32)
    b_i2o = scale * jax.random.normal(ks[3], (1, I), jnp.float32)
    w_o2o = scale * jax.random.normal(ks[4], (H + I, I), jnp.float32)   # cat([hidden, out1])
    b_o2o = scale * jax.random.normal(ks[5], (1, I), jnp.float32)

    return (w_i2h[:I, :], w_i2h[I:, :], b_i2h,
            w_i2o[:I, :], w_i2o[I:, :], b_i2o,
            w_o2o[:H, :], w_o2o[H:, :], b_o2o)


def rnn_step_ref(x, h, params):
    (wih_x, wih_h, bih, wio_x, wio_h, bio, woo_h, woo_o, boo) = params
    hidden_new = jnp.maximum(x @ wih_x + h @ wih_h + bih, 0.0)
    out1 = jnp.maximum(x @ wio_x + h @ wio_h + bio, 0.0)
    logits = hidden_new @ woo_h + out1 @ woo_o + boo
    return jax.nn.log_softmax(logits, axis=1), hidden_new


def rnn_sequence_ref(xs, h0, params):
    def step(h, x):
        lp, h_new = rnn_step_ref(x, h, params)
        return h_new, lp
    h_final, lps = jax.lax.scan(step, h0, xs)
    return lps, h_final


if __name__ == "__main__":
    batch = 2
    input_size = 51      # charset_size = dict_size + 1
    hidden_size = 32
    seq_len = 8

    key = jax.random.PRNGKey(0)
    k_param, k_x = jax.random.split(key)

    params = init_params(k_param, input_size, hidden_size)

    # deterministic one-hot char sequence (as name2tensor would produce)
    char_idx = jax.random.randint(k_x, (seq_len, batch), 0, input_size)
    xs = jax.nn.one_hot(char_idx, input_size, dtype=jnp.float32)    # (T, B, I)
    h0 = jnp.zeros((batch, hidden_size), jnp.float32)               # init_hidden

    log_probs, h_final = rnn_sequence_forward(xs, h0, params)
    jax.block_until_ready((log_probs, h_final))

    ref_lp, ref_h = rnn_sequence_ref(xs, h0, params)
    err_lp = float(np.max(np.abs(np.asarray(log_probs) - np.asarray(ref_lp))))
    err_h = float(np.max(np.abs(np.asarray(h_final) - np.asarray(ref_h))))
    assert err_lp < 1e-4, err_lp
    assert err_h < 1e-4, err_h

    print("KERNEL_OK")
</pallas_src>

<mosaic_0001>
module attributes {stable_mosaic.version = 11 : i64} {
  func.func @rnn_chunk_kernel(%arg0: i32, %arg1: memref<8x8x128xf32, #tpu.memory_space<vmem>>, %arg2: memref<8x128xf32, #tpu.memory_space<vmem>>, %arg3: memref<128x256xf32, #tpu.memory_space<vmem>>, %arg4: memref<128x256xf32, #tpu.memory_space<vmem>>, %arg5: memref<1x256xf32, #tpu.memory_space<vmem>>, %arg6: memref<256x128xf32, #tpu.memory_space<vmem>>, %arg7: memref<1x128xf32, #tpu.memory_space<vmem>>, %arg8: memref<8x8x128xf32, #tpu.memory_space<vmem>>, %arg9: memref<8x128xf32, #tpu.memory_space<vmem>>, %arg10: memref<8x128xf32, #tpu.memory_space<vmem>>, %arg11: memref<64x256xf32, #tpu.memory_space<vmem>>, %arg12: memref<64x256xf32, #tpu.memory_space<vmem>>) attributes {dimension_semantics = [#tpu.dimension_semantics<arbitrary>], iteration_bounds = array<i64: 1>, scalar_prefetch = 0 : i64, scratch_operands = 3 : i64, tpu.core_type = #tpu.core_type<tc>, window_params = [{transform_indices = @transform_0, window_bounds = array<i64: 8, 8, 128>}, {pipeline_mode = #tpu.pipeline_mode<synchronous>, transform_indices = @transform_1, window_bounds = array<i64: 8, 128>}, {pipeline_mode = #tpu.pipeline_mode<synchronous>, transform_indices = @transform_2, window_bounds = array<i64: 128, 256>}, {pipeline_mode = #tpu.pipeline_mode<synchronous>, transform_indices = @transform_3, window_bounds = array<i64: 128, 256>}, {pipeline_mode = #tpu.pipeline_mode<synchronous>, transform_indices = @transform_4, window_bounds = array<i64: 1, 256>}, {pipeline_mode = #tpu.pipeline_mode<synchronous>, transform_indices = @transform_5, window_bounds = array<i64: 256, 128>}, {pipeline_mode = #tpu.pipeline_mode<synchronous>, transform_indices = @transform_6, window_bounds = array<i64: 1, 128>}, {transform_indices = @transform_7, window_bounds = array<i64: 8, 8, 128>}, {pipeline_mode = #tpu.pipeline_mode<synchronous>, transform_indices = @transform_8, window_bounds = array<i64: 8, 128>}]} {
    %c0_i32 = arith.constant 0 : i32
    %0 = arith.cmpi eq, %arg0, %c0_i32 : i32
    %1 = arith.extui %0 : i1 to i32
    %c0_i32_0 = arith.constant 0 : i32
    %2 = arith.cmpi ne, %1, %c0_i32_0 : i32
    scf.if %2 {
      %c0_86 = arith.constant 0 : index
      %c0_87 = arith.constant 0 : index
      %156 = vector.load %arg2[%c0_86, %c0_87] : memref<8x128xf32, #tpu.memory_space<vmem>>, vector<8x128xf32>
      %c0_88 = arith.constant 0 : index
      %c0_89 = arith.constant 0 : index
      %157 = vector.load %arg10[%c0_88, %c0_89] : memref<8x128xf32, #tpu.memory_space<vmem>>, vector<8x128xf32>
      tpu.vector_store %arg10[%c0_88, %c0_89], %156 {strides = array<i32>} : memref<8x128xf32, #tpu.memory_space<vmem>>, vector<8x128xf32>,
    } else {
    }
    %c0 = arith.constant 0 : index
    %c0_1 = arith.constant 0 : index
    %c0_2 = arith.constant 0 : index
    %3 = vector.load %arg1[%c0, %c0_1, %c0_2] : memref<8x8x128xf32, #tpu.memory_space<vmem>>, vector<8x8x128xf32>
    %4 = vector.shape_cast %3 : vector<8x8x128xf32> to vector<64x128xf32>
    %c0_3 = arith.constant 0 : index
    %c0_4 = arith.constant 0 : index
    %5 = vector.load %arg3[%c0_3, %c0_4] : memref<128x256xf32, #tpu.memory_space<vmem>>, vector<128x256xf32>
    %cst = arith.constant dense<0.000000e+00> : vector<64x256xf32>
    %6 = tpu.matmul %4, %5, %cst {dimension_numbers = #tpu.dot_dimension_numbers<[1], [0], [0], [1], [0, 0, 1, 1], [], []>} : vector<64x128xf32>, vector<128x256xf32>, vector<64x256xf32> -> vector<64x256xf32>
    %c0_5 = arith.constant 0 : index
    %c0_6 = arith.constant 0 : index
    %7 = vector.load %arg5[%c0_5, %c0_6] : memref<1x256xf32, #tpu.memory_space<vmem>>, vector<1x256xf32>
    %8 = vector.broadcast %7 : vector<1x256xf32> to vector<64x256xf32>
    %9 = arith.addf %6, %8 : vector<64x256xf32>
    %c0_7 = arith.constant 0 : index
    %c0_8 = arith.constant 0 : index
    %10 = vector.load %arg11[%c0_7, %c0_8] : memref<64x256xf32, #tpu.memory_space<vmem>>, vector<64x256xf32>
    tpu.vector_store %arg11[%c0_7, %c0_8], %9 {strides = array<i32>} : memref<64x256xf32, #tpu.memory_space<vmem>>, vector<64x256xf32>,
    %c0_9 = arith.constant 0 : index
    %c0_10 = arith.constant 0 : index
    %11 = vector.load %arg4[%c0_9, %c0_10] : memref<128x256xf32, #tpu.memory_space<vmem>>, vector<128x256xf32>
    %c0_11 = arith.constant 0 : index
    %c0_12 = arith.constant 0 : index
    %12 = vector.load %arg10[%c0_11, %c0_12] : memref<8x128xf32, #tpu.memory_space<vmem>>, vector<8x128xf32>
    %c0_i32_13 = arith.constant 0 : i32
    %c8_i32 = arith.constant 8 : i32
    %13 = arith.muli %c0_i32_13, %c8_i32 : i32
    %14 = tpu.assume_multiple %13, 8 : i32
    %15 = arith.index_cast %14 : i32 to index
    %c0_14 = arith.constant 0 : index
    %16 = vector.load %arg11[%15, %c0_14] : memref<64x256xf32, #tpu.memory_space<vmem>>, vector<8x256xf32>
    %cst_15 = arith.constant dense<0.000000e+00> : vector<8x256xf32>
    %17 = tpu.matmul %12, %11, %cst_15 {dimension_numbers = #tpu.dot_dimension_numbers<[1], [0], [0], [1], [0, 0, 1, 1], [], []>} : vector<8x128xf32>, vector<128x256xf32>, vector<8x256xf32> -> vector<8x256xf32>
    %18 = arith.addf %16, %17 : vector<8x256xf32>
    %cst_16 = arith.constant 0.000000e+00 : f32
    %19 = vector.broadcast %cst_16 : f32 to vector<8x256xf32>
    %20 = arith.maximumf %18, %19 : vector<8x256xf32>
    %21 = arith.index_cast %14 : i32 to index
    %c0_17 = arith.constant 0 : index
    %22 = vector.load %arg12[%21, %c0_17] : memref<64x256xf32, #tpu.memory_space<vmem>>, vector<8x256xf32>
    tpu.vector_store %arg12[%21, %c0_17], %20 {strides = array<i32>} : memref<64x256xf32, #tpu.memory_space<vmem>>, vector<8x256xf32>,
    %23 = vector.extract_strided_slice %20 {offsets = [0, 128], sizes = [8, 128], strides = [1, 1]} : vector<8x256xf32> to vector<8x128xf32>
    %c8_i32_18 = arith.constant 8 : i32
    %24 = arith.muli %arg0, %c8_i32_18 : i32
    %25 = arith.addi %24, %c0_i32_13 : i32
    %c8_i32_19 = arith.constant 8 : i32
    %26 = arith.cmpi slt, %25, %c8_i32_19 : i32
    %27 = arith.select %26, %23, %12 : vector<8x128xf32>
    %c1_i32 = arith.constant 1 : i32
    %c8_i32_20 = arith.constant 8 : i32
    %28 = arith.muli %c1_i32, %c8_i32_20 : i32
    %29 = tpu.assume_multiple %28, 8 : i32
    %30 = arith.index_cast %29 : i32 to index
    %c0_21 = arith.constant 0 : index
    %31 = vector.load %arg11[%30, %c0_21] : memref<64x256xf32, #tpu.memory_space<vmem>>, vector<8x256xf32>
    %cst_22 = arith.constant dense<0.000000e+00> : vector<8x256xf32>
    %32 = tpu.matmul %27, %11, %cst_22 {dimension_numbers = #tpu.dot_dimension_numbers<[1], [0], [0], [1], [0, 0, 1, 1], [], []>} : vector<8x128xf32>, vector<128x256xf32>, vector<8x256xf32> -> vector<8x256xf32>
    %33 = arith.addf %31, %32 : vector<8x256xf32>
    %cst_23 = arith.constant 0.000000e+00 : f32
    %34 = vector.broadcast %cst_23 : f32 to vector<8x256xf32>
    %35 = arith.maximumf %33, %34 : vector<8x256xf32>
    %36 = arith.index_cast %29 : i32 to index
    %c0_24 = arith.constant 0 : index
    %37 = vector.load %arg12[%36, %c0_24] : memref<64x256xf32, #tpu.memory_space<vmem>>, vector<8x256xf32>
    tpu.vector_store %arg12[%36, %c0_24], %35 {strides = array<i32>} : memref<64x256xf32, #tpu.memory_space<vmem>>, vector<8x256xf32>,
    %38 = vector.extract_strided_slice %35 {offsets = [0, 128], sizes = [8, 128], strides = [1, 1]} : vector<8x256xf32> to vector<8x128xf32>
    %c8_i32_25 = arith.constant 8 : i32
    %39 = arith.muli %arg0, %c8_i32_25 : i32
    %40 = arith.addi %39, %c1_i32 : i32
    %c8_i32_26 = arith.constant 8 : i32
    %41 = arith.cmpi slt, %40, %c8_i32_26 : i32
    %42 = arith.select %41, %38, %27 : vector<8x128xf32>
    %c2_i32 = arith.constant 2 : i32
    %c8_i32_27 = arith.constant 8 : i32
    %43 = arith.muli %c2_i32, %c8_i32_27 : i32
    %44 = tpu.assume_multiple %43, 8 : i32
    %45 = arith.index_cast %44 : i32 to index
    %c0_28 = arith.constant 0 : index
    %46 = vector.load %arg11[%45, %c0_28] : memref<64x256xf32, #tpu.memory_space<vmem>>, vector<8x256xf32>
    %cst_29 = arith.constant dense<0.000000e+00> : vector<8x256xf32>
    %47 = tpu.matmul %42, %11, %cst_29 {dimension_numbers = #tpu.dot_dimension_numbers<[1], [0], [0], [1], [0, 0, 1, 1], [], []>} : vector<8x128xf32>, vector<128x256xf32>, vector<8x256xf32> -> vector<8x256xf32>
    %48 = arith.addf %46, %47 : vector<8x256xf32>
    %cst_30 = arith.constant 0.000000e+00 : f32
    %49 = vector.broadcast %cst_30 : f32 to vector<8x256xf32>
    %50 = arith.maximumf %48, %49 : vector<8x256xf32>
    %51 = arith.index_cast %44 : i32 to index
    %c0_31 = arith.constant 0 : index
    %52 = vector.load %arg12[%51, %c0_31] : memref<64x256xf32, #tpu.memory_space<vmem>>, vector<8x256xf32>
    tpu.vector_store %arg12[%51, %c0_31], %50 {strides = array<i32>} : memref<64x256xf32, #tpu.memory_space<vmem>>, vector<8x256xf32>,
    %53 = vector.extract_strided_slice %50 {offsets = [0, 128], sizes = [8, 128], strides = [1, 1]} : vector<8x256xf32> to vector<8x128xf32>
    %c8_i32_32 = arith.constant 8 : i32
    %54 = arith.muli %arg0, %c8_i32_32 : i32
    %55 = arith.addi %54, %c2_i32 : i32
    %c8_i32_33 = arith.constant 8 : i32
    %56 = arith.cmpi slt, %55, %c8_i32_33 : i32
    %57 = arith.select %56, %53, %42 : vector<8x128xf32>
    %c3_i32 = arith.constant 3 : i32
    %c8_i32_34 = arith.constant 8 : i32
    %58 = arith.muli %c3_i32, %c8_i32_34 : i32
    %59 = tpu.assume_multiple %58, 8 : i32
    %60 = arith.index_cast %59 : i32 to index
    %c0_35 = arith.constant 0 : index
    %61 = vector.load %arg11[%60, %c0_35] : memref<64x256xf32, #tpu.memory_space<vmem>>, vector<8x256xf32>
    %cst_36 = arith.constant dense<0.000000e+00> : vector<8x256xf32>
    %62 = tpu.matmul %57, %11, %cst_36 {dimension_numbers = #tpu.dot_dimension_numbers<[1], [0], [0], [1], [0, 0, 1, 1], [], []>} : vector<8x128xf32>, vector<128x256xf32>, vector<8x256xf32> -> vector<8x256xf32>
    %63 = arith.addf %61, %62 : vector<8x256xf32>
    %cst_37 = arith.constant 0.000000e+00 : f32
    %64 = vector.broadcast %cst_37 : f32 to vector<8x256xf32>
    %65 = arith.maximumf %63, %64 : vector<8x256xf32>
    %66 = arith.index_cast %59 : i32 to index
    %c0_38 = arith.constant 0 : index
    %67 = vector.load %arg12[%66, %c0_38] : memref<64x256xf32, #tpu.memory_space<vmem>>, vector<8x256xf32>
    tpu.vector_store %arg12[%66, %c0_38], %65 {strides = array<i32>} : memref<64x256xf32, #tpu.memory_space<vmem>>, vector<8x256xf32>,
    %68 = vector.extract_strided_slice %65 {offsets = [0, 128], sizes = [8, 128], strides = [1, 1]} : vector<8x256xf32> to vector<8x128xf32>
    %c8_i32_39 = arith.constant 8 : i32
    %69 = arith.muli %arg0, %c8_i32_39 : i32
    %70 = arith.addi %69, %c3_i32 : i32
    %c8_i32_40 = arith.constant 8 : i32
    %71 = arith.cmpi slt, %70, %c8_i32_40 : i32
    %72 = arith.select %71, %68, %57 : vector<8x128xf32>
    %c4_i32 = arith.constant 4 : i32
    %c8_i32_41 = arith.constant 8 : i32
    %73 = arith.muli %c4_i32, %c8_i32_41 : i32
    %74 = tpu.assume_multiple %73, 8 : i32
    %75 = arith.index_cast %74 : i32 to index
    %c0_42 = arith.constant 0 : index
    %76 = vector.load %arg11[%75, %c0_42] : memref<64x256xf32, #tpu.memory_space<vmem>>, vector<8x256xf32>
    %cst_43 = arith.constant dense<0.000000e+00> : vector<8x256xf32>
    %77 = tpu.matmul %72, %11, %cst_43 {dimension_numbers = #tpu.dot_dimension_numbers<[1], [0], [0], [1], [0, 0, 1, 1], [], []>} : vector<8x128xf32>, vector<128x256xf32>, vector<8x256xf32> -> vector<8x256xf32>
    %78 = arith.addf %76, %77 : vector<8x256xf32>
    %cst_44 = arith.constant 0.000000e+00 : f32
    %79 = vector.broadcast %cst_44 : f32 to vector<8x256xf32>
    %80 = arith.maximumf %78, %79 : vector<8x256xf32>
    %81 = arith.index_cast %74 : i32 to index
    %c0_45 = arith.constant 0 : index
    %82 = vector.load %arg12[%81, %c0_45] : memref<64x256xf32, #tpu.memory_space<vmem>>, vector<8x256xf32>
    tpu.vector_store %arg12[%81, %c0_45], %80 {strides = array<i32>} : memref<64x256xf32, #tpu.memory_space<vmem>>, vector<8x256xf32>,
    %83 = vector.extract_strided_slice %80 {offsets = [0, 128], sizes = [8, 128], strides = [1, 1]} : vector<8x256xf32> to vector<8x128xf32>
    %c8_i32_46 = arith.constant 8 : i32
    %84 = arith.muli %arg0, %c8_i32_46 : i32
    %85 = arith.addi %84, %c4_i32 : i32
    %c8_i32_47 = arith.constant 8 : i32
    %86 = arith.cmpi slt, %85, %c8_i32_47 : i32
    %87 = arith.select %86, %83, %72 : vector<8x128xf32>
    %c5_i32 = arith.constant 5 : i32
    %c8_i32_48 = arith.constant 8 : i32
    %88 = arith.muli %c5_i32, %c8_i32_48 : i32
    %89 = tpu.assume_multiple %88, 8 : i32
    %90 = arith.index_cast %89 : i32 to index
    %c0_49 = arith.constant 0 : index
    %91 = vector.load %arg11[%90, %c0_49] : memref<64x256xf32, #tpu.memory_space<vmem>>, vector<8x256xf32>
    %cst_50 = arith.constant dense<0.000000e+00> : vector<8x256xf32>
    %92 = tpu.matmul %87, %11, %cst_50 {dimension_numbers = #tpu.dot_dimension_numbers<[1], [0], [0], [1], [0, 0, 1, 1], [], []>} : vector<8x128xf32>, vector<128x256xf32>, vector<8x256xf32> -> vector<8x256xf32>
    %93 = arith.addf %91, %92 : vector<8x256xf32>
    %cst_51 = arith.constant 0.000000e+00 : f32
    %94 = vector.broadcast %cst_51 : f32 to vector<8x256xf32>
    %95 = arith.maximumf %93, %94 : vector<8x256xf32>
    %96 = arith.index_cast %89 : i32 to index
    %c0_52 = arith.constant 0 : index
    %97 = vector.load %arg12[%96, %c0_52] : memref<64x256xf32, #tpu.memory_space<vmem>>, vector<8x256xf32>
    tpu.vector_store %arg12[%96, %c0_52], %95 {strides = array<i32>} : memref<64x256xf32, #tpu.memory_space<vmem>>, vector<8x256xf32>,
    %98 = vector.extract_strided_slice %95 {offsets = [0, 128], sizes = [8, 128], strides = [1, 1]} : vector<8x256xf32> to vector<8x128xf32>
    %c8_i32_53 = arith.constant 8 : i32
    %99 = arith.muli %arg0, %c8_i32_53 : i32
    %100 = arith.addi %99, %c5_i32 : i32
    %c8_i32_54 = arith.constant 8 : i32
    %101 = arith.cmpi slt, %100, %c8_i32_54 : i32
    %102 = arith.select %101, %98, %87 : vector<8x128xf32>
    %c6_i32 = arith.constant 6 : i32
    %c8_i32_55 = arith.constant 8 : i32
    %103 = arith.muli %c6_i32, %c8_i32_55 : i32
    %104 = tpu.assume_multiple %103, 8 : i32
    %105 = arith.index_cast %104 : i32 to index
    %c0_56 = arith.constant 0 : index
    %106 = vector.load %arg11[%105, %c0_56] : memref<64x256xf32, #tpu.memory_space<vmem>>, vector<8x256xf32>
    %cst_57 = arith.constant dense<0.000000e+00> : vector<8x256xf32>
    %107 = tpu.matmul %102, %11, %cst_57 {dimension_numbers = #tpu.dot_dimension_numbers<[1], [0], [0], [1], [0, 0, 1, 1], [], []>} : vector<8x128xf32>, vector<128x256xf32>, vector<8x256xf32> -> vector<8x256xf32>
    %108 = arith.addf %106, %107 : vector<8x256xf32>
    %cst_58 = arith.constant 0.000000e+00 : f32
    %109 = vector.broadcast %cst_58 : f32 to vector<8x256xf32>
    %110 = arith.maximumf %108, %109 : vector<8x256xf32>
    %111 = arith.index_cast %104 : i32 to index
    %c0_59 = arith.constant 0 : index
    %112 = vector.load %arg12[%111, %c0_59] : memref<64x256xf32, #tpu.memory_space<vmem>>, vector<8x256xf32>
    tpu.vector_store %arg12[%111, %c0_59], %110 {strides = array<i32>} : memref<64x256xf32, #tpu.memory_space<vmem>>, vector<8x256xf32>,
    %113 = vector.extract_strided_slice %110 {offsets = [0, 128], sizes = [8, 128], strides = [1, 1]} : vector<8x256xf32> to vector<8x128xf32>
    %c8_i32_60 = arith.constant 8 : i32
    %114 = arith.muli %arg0, %c8_i32_60 : i32
    %115 = arith.addi %114, %c6_i32 : i32
    %c8_i32_61 = arith.constant 8 : i32
    %116 = arith.cmpi slt, %115, %c8_i32_61 : i32
    %117 = arith.select %116, %113, %102 : vector<8x128xf32>
    %c7_i32 = arith.constant 7 : i32
    %c8_i32_62 = arith.constant 8 : i32
    %118 = arith.muli %c7_i32, %c8_i32_62 : i32
    %119 = tpu.assume_multiple %118, 8 : i32
    %120 = arith.index_cast %119 : i32 to index
    %c0_63 = arith.constant 0 : index
    %121 = vector.load %arg11[%120, %c0_63] : memref<64x256xf32, #tpu.memory_space<vmem>>, vector<8x256xf32>
    %cst_64 = arith.constant dense<0.000000e+00> : vector<8x256xf32>
    %122 = tpu.matmul %117, %11, %cst_64 {dimension_numbers = #tpu.dot_dimension_numbers<[1], [0], [0], [1], [0, 0, 1, 1], [], []>} : vector<8x128xf32>, vector<128x256xf32>, vector<8x256xf32> -> vector<8x256xf32>
    %123 = arith.addf %121, %122 : vector<8x256xf32>
    %cst_65 = arith.constant 0.000000e+00 : f32
    %124 = vector.broadcast %cst_65 : f32 to vector<8x256xf32>
    %125 = arith.maximumf %123, %124 : vector<8x256xf32>
    %126 = arith.index_cast %119 : i32 to index
    %c0_66 = arith.constant 0 : index
    %127 = vector.load %arg12[%126, %c0_66] : memref<64x256xf32, #tpu.memory_space<vmem>>, vector<8x256xf32>
    tpu.vector_store %arg12[%126, %c0_66], %125 {strides = array<i32>} : memref<64x256xf32, #tpu.memory_space<vmem>>, vector<8x256xf32>,
    %128 = vector.extract_strided_slice %125 {offsets = [0, 128], sizes = [8, 128], strides = [1, 1]} : vector<8x256xf32> to vector<8x128xf32>
    %c8_i32_67 = arith.constant 8 : i32
    %129 = arith.muli %arg0, %c8_i32_67 : i32
    %130 = arith.addi %129, %c7_i32 : i32
    %c8_i32_68 = arith.constant 8 : i32
    %131 = arith.cmpi slt, %130, %c8_i32_68 : i32
    %132 = arith.select %131, %128, %117 : vector<8x128xf32>
    %c8_i32_69 = arith.constant 8 : i32
    %c0_70 = arith.constant 0 : index
    %c0_71 = arith.constant 0 : index
    %133 = vector.load %arg10[%c0_70, %c0_71] : memref<8x128xf32, #tpu.memory_space<vmem>>, vector<8x128xf32>
    tpu.vector_store %arg10[%c0_70, %c0_71], %132 {strides = array<i32>} : memref<8x128xf32, #tpu.memory_space<vmem>>, vector<8x128xf32>,
    %c0_72 = arith.constant 0 : index
    %c0_73 = arith.constant 0 : index
    %134 = vector.load %arg12[%c0_72, %c0_73] : memref<64x256xf32, #tpu.memory_space<vmem>>, vector<64x256xf32>
    %c0_74 = arith.constant 0 : index
    %c0_75 = arith.constant 0 : index
    %135 = vector.load %arg6[%c0_74, %c0_75] : memref<256x128xf32, #tpu.memory_space<vmem>>, vector<256x128xf32>
    %cst_76 = arith.constant dense<0.000000e+00> : vector<64x128xf32>
    %136 = tpu.matmul %134, %135, %cst_76 {dimension_numbers = #tpu.dot_dimension_numbers<[1], [0], [0], [1], [0, 0, 1, 1], [], []>} : vector<64x256xf32>, vector<256x128xf32>, vector<64x128xf32> -> vector<64x128xf32>
    %c0_77 = arith.constant 0 : index
    %c0_78 = arith.constant 0 : index
    %137 = vector.load %arg7[%c0_77, %c0_78] : memref<1x128xf32, #tpu.memory_space<vmem>>, vector<1x128xf32>
    %138 = vector.broadcast %137 : vector<1x128xf32> to vector<64x128xf32>
    %139 = arith.addf %136, %138 : vector<64x128xf32>
    %cst_79 = arith.constant dense<0xFF800000> : vector<64xf32>
    %140 = vector.multi_reduction <maximumf>, %139, %cst_79 [1] : vector<64x128xf32> to vector<64xf32>
    %141 = vector.shape_cast %140 : vector<64xf32> to vector<64x1xf32>
    %142 = vector.broadcast %141 : vector<64x1xf32> to vector<64x128xf32>
    %143 = arith.subf %139, %142 : vector<64x128xf32>
    %144 = math.exp %143 : vector<64x128xf32>
    %cst_80 = arith.constant dense<0.000000e+00> : vector<64xf32>
    %145 = vector.multi_reduction <add>, %144, %cst_80 [1] : vector<64x128xf32> to vector<64xf32>
    %146 = vector.shape_cast %145 : vector<64xf32> to vector<64x1xf32>
    %147 = math.log %146 : vector<64x1xf32>
    %148 = arith.addf %141, %147 : vector<64x1xf32>
    %149 = vector.broadcast %148 : vector<64x1xf32> to vector<64x128xf32>
    %150 = arith.subf %139, %149 : vector<64x128xf32>
    %151 = vector.shape_cast %150 : vector<64x128xf32> to vector<8x8x128xf32>
    %c0_81 = arith.constant 0 : index
    %c0_82 = arith.constant 0 : index
    %c0_83 = arith.constant 0 : index
    %152 = vector.load %arg8[%c0_81, %c0_82, %c0_83] : memref<8x8x128xf32, #tpu.memory_space<vmem>>, vector<8x8x128xf32>
    tpu.vector_store %arg8[%c0_81, %c0_82, %c0_83], %151 {strides = array<i32>} : memref<8x8x128xf32, #tpu.memory_space<vmem>>, vector<8x8x128xf32>,
    %c0_i32_84 = arith.constant 0 : i32
    %153 = arith.cmpi eq, %arg0, %c0_i32_84 : i32
    %154 = arith.extui %153 : i1 to i32
    %c0_i32_85 = arith.constant 0 : i32
    %155 = arith.cmpi ne, %154, %c0_i32_85 : i32
    scf.if %155 {
      %c0_86 = arith.constant 0 : index
      %c0_87 = arith.constant 0 : index
      %156 = vector.load %arg9[%c0_86, %c0_87] : memref<8x128xf32, #tpu.memory_space<vmem>>, vector<8x128xf32>
      tpu.vector_store %arg9[%c0_86, %c0_87], %132 {strides = array<i32>} : memref<8x128xf32, #tpu.memory_space<vmem>>, vector<8x128xf32>,
    } else {
    }
    return
  }
  func.func @transform_0(%arg0: i32) -> (i32, i32, i32) {
    %c0_i32 = arith.constant 0 : i32
    %c0_i32_0 = arith.constant 0 : i32
    %c0_i32_1 = arith.constant 0 : i32
    return %arg0, %c0_i32, %c0_i32_0 : i32, i32, i32
  }
  func.func @transform_1(%arg0: i32) -> (i32, i32) {
    %c0_i32 = arith.constant 0 : i32
    %c0_i32_0 = arith.constant 0 : i32
    %c0_i32_1 = arith.constant 0 : i32
    return %c0_i32, %c0_i32_0 : i32, i32
  }
  func.func @transform_2(%arg0: i32) -> (i32, i32) {
    %c0_i32 = arith.constant 0 : i32
    %c0_i32_0 = arith.constant 0 : i32
    %c0_i32_1 = arith.constant 0 : i32
    return %c0_i32, %c0_i32_0 : i32, i32
  }
  func.func @transform_3(%arg0: i32) -> (i32, i32) {
    %c0_i32 = arith.constant 0 : i32
    %c0_i32_0 = arith.constant 0 : i32
    %c0_i32_1 = arith.constant 0 : i32
    return %c0_i32, %c0_i32_0 : i32, i32
  }
  func.func @transform_4(%arg0: i32) -> (i32, i32) {
    %c0_i32 = arith.constant 0 : i32
    %c0_i32_0 = arith.constant 0 : i32
    %c0_i32_1 = arith.constant 0 : i32
    return %c0_i32, %c0_i32_0 : i32, i32
  }
  func.func @transform_5(%arg0: i32) -> (i32, i32) {
    %c0_i32 = arith.constant 0 : i32
    %c0_i32_0 = arith.constant 0 : i32
    %c0_i32_1 = arith.constant 0 : i32
    return %c0_i32, %c0_i32_0 : i32, i32
  }
  func.func @transform_6(%arg0: i32) -> (i32, i32) {
    %c0_i32 = arith.constant 0 : i32
    %c0_i32_0 = arith.constant 0 : i32
    %c0_i32_1 = arith.constant 0 : i32
    return %c0_i32, %c0_i32_0 : i32, i32
  }
  func.func @transform_7(%arg0: i32) -> (i32, i32, i32) {
    %c0_i32 = arith.constant 0 : i32
    %c0_i32_0 = arith.constant 0 : i32
    %c0_i32_1 = arith.constant 0 : i32
    return %arg0, %c0_i32, %c0_i32_0 : i32, i32, i32
  }
  func.func @transform_8(%arg0: i32) -> (i32, i32) {
    %c0_i32 = arith.constant 0 : i32
    %c0_i32_0 = arith.constant 0 : i32
    %c0_i32_1 = arith.constant 0 : i32
    return %c0_i32, %c0_i32_0 : i32, i32
  }
}

</mosaic_0001>

<llo_original>
// kernel: tpu_custom_call.1
$region0: #{tpu_custom_call.1}
  #allocation0 [shape = 'u32[]', space=smem, size = 0x4, offset = 0x4, fixed_abs, tag = 'smem constant byte address 0x4 - core index']
  #allocation1 [shape = 'u32[72,128]{1,0:T(1,128)}', space=vmem, size = 0x9000, scoped, tag = 'internal scratch']
  #allocation2 [shape = 'f32[8,128]{1,0:T(8,128)}', space=vmem, size = 0x1000, scoped, tag = 'scratch operand']
  #allocation3 [shape = 'f32[64,256]{1,0:T(8,128)}', space=vmem, size = 0x10000, scoped, tag = 'scratch operand']
  #allocation4 [shape = 'f32[64,256]{1,0:T(8,128)}', space=vmem, size = 0x10000, scoped, tag = 'scratch operand']
  %s0 = inlined_call_operand.hbm [shape: f32[8,8,128], index: 0, kind: input, shape index: {}]
  %s1 = inlined_call_operand.hbm [shape: f32[8,128], index: 1, kind: input, shape index: {}]
  %s2 = inlined_call_operand.hbm [shape: f32[128,256], index: 2, kind: input, shape index: {}]
  %s3 = inlined_call_operand.hbm [shape: f32[128,256], index: 3, kind: input, shape index: {}]
  %s4 = inlined_call_operand.vmem [shape: f32[1,256], index: 4, kind: input, shape index: {}]
  %s5 = inlined_call_operand.hbm [shape: f32[256,128], index: 5, kind: input, shape index: {}]
  %s6 = inlined_call_operand.vmem [shape: f32[1,128], index: 6, kind: input, shape index: {}]
  %s7 = inlined_call_operand.hbm [shape: f32[8,8,128], index: 7, kind: output, shape index: {0}]
  %s8 = inlined_call_operand.hbm [shape: f32[8,128], index: 8, kind: output, shape index: {1}]
  %9 = xla_tuple %s7, %s8
  %s10 = sld [smem:[#allocation0]]
  $region74: #{tpu_custom_call.1} parent=0
    _
  %s12 = ssub.s32 1, %s10
  %s13 = scalar_select 0, %s12, %s10
  $region1: #{tpu_custom_call.1} parent=0
    #allocation5 [shape = 'u8[32768]{0}', space=vmem, size = 0x8000, scoped, tag = 'input window, operand 0, single buffered']
    #allocation6 [shape = 's32[1]{0}', space=sflag, size = 0x4, scoped, tag = 'scoped memory for tpu_custom_call.1']
    #allocation7 [shape = 's32[1]{0}', space=sflag, size = 0x4, scoped, tag = 'scoped memory for tpu_custom_call.1']
    #allocation8 [shape = 'u8[4096]{0}', space=vmem, size = 0x1000, scoped, tag = 'input window, operand 1, single buffered']
    #allocation9 [shape = 's32[1]{0}', space=sflag, size = 0x4, scoped, tag = 'scoped memory for tpu_custom_call.1']
    #allocation10 [shape = 'u8[131072]{0}', space=vmem, size = 0x20000, scoped, tag = 'input window, operand 2, single buffered']
    #allocation11 [shape = 'u8[131072]{0}', space=vmem, size = 0x20000, scoped, tag = 'input window, operand 3, single buffered']
    #allocation12 [shape = 's32[1]{0}', space=sflag, size = 0x4, scoped, tag = 'scoped memory for tpu_custom_call.1']
    #allocation13 [shape = 'u8[131072]{0}', space=vmem, size = 0x20000, scoped, tag = 'input window, operand 5, single buffered']
    #allocation14 [shape = 'u8[32768]{0}', space=vmem, size = 0x8000, scoped, tag = 'output window, operand 0, single buffered']
    #allocation15 [shape = 'u8[4096]{0}', space=vmem, size = 0x1000, scoped, tag = 'output window, operand 1, single buffered']
    #allocation16 [shape = 's32[1]{0}', space=sflag, size = 0x4, scoped, tag = 'scoped memory for tpu_custom_call.1']
    %14 = vsyncpa [#allocation6], 0
    %15 = vsyncpa [#allocation9], 0
    %16 = vsyncpa [#allocation12], 0
    %17 = vsyncpa [#allocation7], 0
    %18 = vsyncpa [#allocation16], 0
    // Predicated region
    $region2: #{tpu_custom_call.1} parent=1 // pred_check
      _
    $region3: #{tpu_custom_call.1} parent=1 // pred_check_branch
      %20 = sbr.rel (0) target = $region5
    $region4: #{tpu_custom_call.1} parent=1 // pred_region
      %22 = vsyncadd [#allocation6], 0
      %s23 = sshll.u32 %s0, 4
      %s24 = int_to_ptr.hbm [resolvable:$true] %s23
      %s25 = sshll.u32 [#allocation5], 4
      %s26 = int_to_ptr.vmem [resolvable:$true] %s25
      %31 = dma.hbm_to_vmem [thread:$0]  %s24, 1024, %s26, [#allocation6], 128, 128, 8
    $region5: #{tpu_custom_call.1} parent=1 // pred_fallthru
      _
    // Predicated region
    $region6: #{tpu_custom_call.1} parent=1 // pred_check
      _
    $region7: #{tpu_custom_call.1} parent=1 // pred_check_branch
      %33 = sbr.rel (0) target = $region9
    $region8: #{tpu_custom_call.1} parent=1 // pred_region
      %35 = vsyncadd [#allocation9], 0
      %s37 = sshll.u32 %s1, 4
      %s38 = int_to_ptr.hbm [resolvable:$true] %s37
      %s39 = sshll.u32 [#allocation8], 4
      %s40 = int_to_ptr.vmem [resolvable:$true] %s39
      %42 = dma.hbm_to_vmem [thread:$0]  %s38, 128, %s40, [#allocation9]
    $region9: #{tpu_custom_call.1} parent=1 // pred_fallthru
      _
    // Predicated region
    $region10: #{tpu_custom_call.1} parent=1 // pred_check
      _
    $region11: #{tpu_custom_call.1} parent=1 // pred_check_branch
      %44 = sbr.rel (0) target = $region13
    $region12: #{tpu_custom_call.1} parent=1 // pred_region
      %46 = vsyncadd [#allocation9], 0
      %s47 = sshll.u32 %s2, 4
      %s48 = int_to_ptr.hbm [resolvable:$true] %s47
      %s49 = sshll.u32 [#allocation10], 4
      %s50 = int_to_ptr.vmem [resolvable:$true] %s49
      %55 = dma.hbm_to_vmem [thread:$0]  %s48, 4096, %s50, [#allocation9], 256, 256, 16
    $region13: #{tpu_custom_call.1} parent=1 // pred_fallthru
      _
    // Predicated region
    $region14: #{tpu_custom_call.1} parent=1 // pred_check
      _
    $region15: #{tpu_custom_call.1} parent=1 // pred_check_branch
      %57 = sbr.rel (0) target = $region17
    $region16: #{tpu_custom_call.1} parent=1 // pred_region
      %59 = vsyncadd [#allocation12], 0
      %s60 = sshll.u32 %s3, 4
      %s61 = int_to_ptr.hbm [resolvable:$true] %s60
      %s62 = sshll.u32 [#allocation11], 4
      %s63 = int_to_ptr.vmem [resolvable:$true] %s62
      %68 = dma.hbm_to_vmem [thread:$0]  %s61, 4096, %s63, [#allocation12], 256, 256, 16
    $region17: #{tpu_custom_call.1} parent=1 // pred_fallthru
      _
    // Predicated region
    $region18: #{tpu_custom_call.1} parent=1 // pred_check
      _
    $region19: #{tpu_custom_call.1} parent=1 // pred_check_branch
      %70 = sbr.rel (0) target = $region21
    $region20: #{tpu_custom_call.1} parent=1 // pred_region
      _
    $region21: #{tpu_custom_call.1} parent=1 // pred_fallthru
      _
    // Predicated region
    $region22: #{tpu_custom_call.1} parent=1 // pred_check
      _
    $region23: #{tpu_custom_call.1} parent=1 // pred_check_branch
      %72 = sbr.rel (0) target = $region25
    $region24: #{tpu_custom_call.1} parent=1 // pred_region
      %74 = vsyncadd [#allocation12], 0
      %s75 = sshll.u32 %s5, 4
      %s76 = int_to_ptr.hbm [resolvable:$true] %s75
      %s77 = sshll.u32 [#allocation13], 4
      %s78 = int_to_ptr.vmem [resolvable:$true] %s77
      %83 = dma.hbm_to_vmem [thread:$0]  %s76, 4096, %s78, [#allocation12], 128, 128, 8
    $region25: #{tpu_custom_call.1} parent=1 // pred_fallthru
      _
    // Predicated region
    $region26: #{tpu_custom_call.1} parent=1 // pred_check
      _
    $region27: #{tpu_custom_call.1} parent=1 // pred_check_branch
      %85 = sbr.rel (0) target = $region29
    $region28: #{tpu_custom_call.1} parent=1 // pred_region
      _
    $region29: #{tpu_custom_call.1} parent=1 // pred_fallthru
      _
    // Predicated region
    $region30: #{tpu_custom_call.1} parent=1 // pred_check
      _
    $region31: #{tpu_custom_call.1} parent=1 // pred_check_branch
      %87 = sbr.rel (0) target = $region33
    $region32: #{tpu_custom_call.1} parent=1 // pred_region
      %89 = dma.done [#allocation6], 1024
    $region33: #{tpu_custom_call.1} parent=1 // pred_fallthru
      _
    // Predicated region
    $region34: #{tpu_custom_call.1} parent=1 // pred_check
      _
    $region35: #{tpu_custom_call.1} parent=1 // pred_check_branch
      %91 = sbr.rel (0) target = $region37
    $region36: #{tpu_custom_call.1} parent=1 // pred_region
      %93 = dma.done [#allocation9], 128
    $region37: #{tpu_custom_call.1} parent=1 // pred_fallthru
      _
    // Predicated region
    $region38: #{tpu_custom_call.1} parent=1 // pred_check
      _
    $region39: #{tpu_custom_call.1} parent=1 // pred_check_branch
      %95 = sbr.rel (0) target = $region41
    $region40: #{tpu_custom_call.1} parent=1 // pred_region
      %97 = dma.done [#allocation9], 4096
    $region41: #{tpu_custom_call.1} parent=1 // pred_fallthru
      _
    // Predicated region
    $region42: #{tpu_custom_call.1} parent=1 // pred_check
      _
    $region43: #{tpu_custom_call.1} parent=1 // pred_check_branch
      %99 = sbr.rel (0) target = $region45
    $region44: #{tpu_custom_call.1} parent=1 // pred_region
      %101 = dma.done [#allocation12], 4096
    $region45: #{tpu_custom_call.1} parent=1 // pred_fallthru
      _
    // Predicated region
    $region46: #{tpu_custom_call.1} parent=1 // pred_check
      _
    $region47: #{tpu_custom_call.1} parent=1 // pred_check_branch
      %103 = sbr.rel (0) target = $region49
    $region48: #{tpu_custom_call.1} parent=1 // pred_region
      %105 = dma.done [#allocation12], 4096
    $region49: #{tpu_custom_call.1} parent=1 // pred_fallthru
      _
    %p106 = scmp.eq.s32.totalorder 0, 0
    // Predicated region
    $region50: #{tpu_custom_call.1} parent=1 // pred_check
      %p107 = pneg %p106
    $region51: #{tpu_custom_call.1} parent=1 // pred_check_branch
      %109 = sbr.rel (%p107) target = $region53
    $region52: #{tpu_custom_call.1} parent=1 // pred_region
      %v110 = vld [vmem:[#allocation8] sm:$0xff]
      %111 = vst [vmem:[#allocation2] sm:$0xff] %v110
    $region53: #{tpu_custom_call.1} parent=1 // pred_fallthru
      _
    %v112 = vld [vmem:[#allocation5] sm:$0xff]
    %v113 = vld [vmem:[#allocation5 + $0x8] sm:$0xff]
    %v114 = vld [vmem:[#allocation5 + $0x10] sm:$0xff]
    %v115 = vld [vmem:[#allocation5 + $0x18] sm:$0xff]
    %v116 = vld [vmem:[#allocation5 + $0x20] sm:$0xff]
    %v117 = vld [vmem:[#allocation5 + $0x28] sm:$0xff]
    %v118 = vld [vmem:[#allocation5 + $0x30] sm:$0xff]
    %v119 = vld [vmem:[#allocation5 + $0x38] sm:$0xff]
    %v120 = vld [vmem:[#allocation10] sm:$0xff]
    %v121 = vld [vmem:[#allocation10 + $0x8] sm:$0xff]
    %v122 = vld [vmem:[#allocation10 + $0x10] sm:$0xff]
    %v123 = vld [vmem:[#allocation10 + $0x18] sm:$0xff]
    %v124 = vld [vmem:[#allocation10 + $0x20] sm:$0xff]
    %v125 = vld [vmem:[#allocation10 + $0x28] sm:$0xff]
    %v126 = vld [vmem:[#allocation10 + $0x30] sm:$0xff]
    %v127 = vld [vmem:[#allocation10 + $0x38] sm:$0xff]
    %v128 = vld [vmem:[#allocation10 + $0x40] sm:$0xff]
    %v129 = vld [vmem:[#allocation10 + $0x48] sm:$0xff]
    %v130 = vld [vmem:[#allocation10 + $0x50] sm:$0xff]
    %v131 = vld [vmem:[#allocation10 + $0x58] sm:$0xff]
    %v132 = vld [vmem:[#allocation10 + $0x60] sm:$0xff]
    %v133 = vld [vmem:[#allocation10 + $0x68] sm:$0xff]
    %v134 = vld [vmem:[#allocation10 + $0x70] sm:$0xff]
    %v135 = vld [vmem:[#allocation10 + $0x78] sm:$0xff]
    %v136 = vld [vmem:[#allocation10 + $0x80] sm:$0xff]
    %v137 = vld [vmem:[#allocation10 + $0x88] sm:$0xff]
    %v138 = vld [vmem:[#allocation10 + $0x90] sm:$0xff]
    %v139 = vld [vmem:[#allocation10 + $0x98] sm:$0xff]
    %v140 = vld [vmem:[#allocation10 + $0xa0] sm:$0xff]
    %v141 = vld [vmem:[#allocation10 + $0xa8] sm:$0xff]
    %v142 = vld [vmem:[#allocation10 + $0xb0] sm:$0xff]
    %v143 = vld [vmem:[#allocation10 + $0xb8] sm:$0xff]
    %v144 = vld [vmem:[#allocation10 + $0xc0] sm:$0xff]
    %v145 = vld [vmem:[#allocation10 + $0xc8] sm:$0xff]
    %v146 = vld [vmem:[#allocation10 + $0xd0] sm:$0xff]
    %v147 = vld [vmem:[#allocation10 + $0xd8] sm:$0xff]
    %v148 = vld [vmem:[#allocation10 + $0xe0] sm:$0xff]
    %v149 = vld [vmem:[#allocation10 + $0xe8] sm:$0xff]
    %v150 = vld [vmem:[#allocation10 + $0xf0] sm:$0xff]
    %v151 = vld [vmem:[#allocation10 + $0xf8] sm:$0xff]
    %v152 = vld [vmem:[%s4] sm:$0x3]
    %v154 = vperm.slane %v152, 0
    %v155 = vperm.slane %v152, 1
    %158 = vmatpush.msra.mxu0 %v150
    %159 = vmatpush.msra.mxu0 %v148
    %160 = vmatpush.msra.mxu0 %v146
    %161 = vmatpush.msra.mxu0 %v144
    %162 = vmatpush.msra.mxu0 %v142
    %163 = vmatpush.msra.mxu0 %v140
    %164 = vmatpush.msra.mxu0 %v138
    %165 = vmatpush.msra.mxu0 %v136
    %166 = vmatpush.msra.mxu0 %v134
    %167 = vmatpush.msra.mxu0 %v132
    %168 = vmatpush.msra.mxu0 %v130
    %169 = vmatpush.msra.mxu0 %v128
    %170 = vmatpush.msra.mxu0 %v126
    %171 = vmatpush.msra.mxu0 %v124
    %172 = vmatpush.msra.mxu0 %v122
    %173 = vmatpush.msra.mxu0 %v120
    %174 = vmatmul.f32.gmra.mxu0 %v112
    %v175 = vpop.f32.mrf.mxu0
    %v176 = vadd.f32 %v154, %v175
    %177 = vmatmul.f32.gmra.mxu0 %v113
    %v178 = vpop.f32.mrf.mxu0
    %v179 = vadd.f32 %v154, %v178
    %180 = vmatmul.f32.gmra.mxu0 %v114
    %v181 = vpop.f32.mrf.mxu0
    %v182 = vadd.f32 %v154, %v181
    %183 = vmatmul.f32.gmra.mxu0 %v115
    %v184 = vpop.f32.mrf.mxu0
    %v185 = vadd.f32 %v154, %v184
    %186 = vmatmul.f32.gmra.mxu0 %v116
    %v187 = vpop.f32.mrf.mxu0
    %v188 = vadd.f32 %v154, %v187
    %189 = vmatmul.f32.gmra.mxu0 %v117
    %v190 = vpop.f32.mrf.mxu0
    %v191 = vadd.f32 %v154, %v190
    %192 = vmatmul.f32.gmra.mxu0 %v118
    %v193 = vpop.f32.mrf.mxu0
    %v194 = vadd.f32 %v154, %v193
    %195 = vmatmul.f32.gmra.mxu0 %v119
    %v196 = vpop.f32.mrf.mxu0
    %v197 = vadd.f32 %v154, %v196
    %198 = vdwg.mxu0
    %199 = vmatpush.msra.mxu0 %v151
    %200 = vmatpush.msra.mxu0 %v149
    %201 = vmatpush.msra.mxu0 %v147
    %202 = vmatpush.msra.mxu0 %v145
    %203 = vmatpush.msra.mxu0 %v143
    %204 = vmatpush.msra.mxu0 %v141
    %205 = vmatpush.msra.mxu0 %v139
    %206 = vmatpush.msra.mxu0 %v137
    %207 = vmatpush.msra.mxu0 %v135
    %208 = vmatpush.msra.mxu0 %v133
    %209 = vmatpush.msra.mxu0 %v131
    %210 = vmatpush.msra.mxu0 %v129
    %211 = vmatpush.msra.mxu0 %v127
    %212 = vmatpush.msra.mxu0 %v125
    %213 = vmatpush.msra.mxu0 %v123
    %214 = vmatpush.msra.mxu0 %v121
    %215 = vmatmul.f32.gmra.mxu0 %v112
    %v216 = vpop.f32.mrf.mxu0
    %v217 = vadd.f32 %v155, %v216
    %218 = vmatmul.f32.gmra.mxu0 %v113
    %v219 = vpop.f32.mrf.mxu0
    %v220 = vadd.f32 %v155, %v219
    %221 = vmatmul.f32.gmra.mxu0 %v114
    %v222 = vpop.f32.mrf.mxu0
    %v223 = vadd.f32 %v155, %v222
    %224 = vmatmul.f32.gmra.mxu0 %v115
    %v225 = vpop.f32.mrf.mxu0
    %v226 = vadd.f32 %v155, %v225
    %227 = vmatmul.f32.gmra.mxu0 %v116
    %v228 = vpop.f32.mrf.mxu0
    %v229 = vadd.f32 %v155, %v228
    %230 = vmatmul.f32.gmra.mxu0 %v117
    %v231 = vpop.f32.mrf.mxu0
    %v232 = vadd.f32 %v155, %v231
    %233 = vmatmul.f32.gmra.mxu0 %v118
    %v234 = vpop.f32.mrf.mxu0
    %v235 = vadd.f32 %v155, %v234
    %236 = vmatmul.f32.gmra.mxu0 %v119
    %v237 = vpop.f32.mrf.mxu0
    %v238 = vadd.f32 %v155, %v237
    %239 = vdwg.mxu0
    %240 = vst [vmem:[#allocation3] sm:$0xff] %v176
    %241 = vst [vmem:[#allocation3 + $0x8] sm:$0xff] %v217
    %242 = vst [vmem:[#allocation3 + $0x10] sm:$0xff] %v179
    %243 = vst [vmem:[#allocation3 + $0x18] sm:$0xff] %v220
    %244 = vst [vmem:[#allocation3 + $0x20] sm:$0xff] %v182
    %245 = vst [vmem:[#allocation3 + $0x28] sm:$0xff] %v223
    %246 = vst [vmem:[#allocation3 + $0x30] sm:$0xff] %v185
    %247 = vst [vmem:[#allocation3 + $0x38] sm:$0xff] %v226
    %248 = vst [vmem:[#allocation3 + $0x40] sm:$0xff] %v188
    %249 = vst [vmem:[#allocation3 + $0x48] sm:$0xff] %v229
    %250 = vst [vmem:[#allocation3 + $0x50] sm:$0xff] %v191
    %251 = vst [vmem:[#allocation3 + $0x58] sm:$0xff] %v232
    %252 = vst [vmem:[#allocation3 + $0x60] sm:$0xff] %v194
    %253 = vst [vmem:[#allocation3 + $0x68] sm:$0xff] %v235
    %254 = vst [vmem:[#allocation3 + $0x70] sm:$0xff] %v197
    %255 = vst [vmem:[#allocation3 + $0x78] sm:$0xff] %v238
    %v256 = vld [vmem:[#allocation11] sm:$0xff]
    %v257 = vld [vmem:[#allocation11 + $0x8] sm:$0xff]
    %v258 = vld [vmem:[#allocation11 + $0x10] sm:$0xff]
    %v259 = vld [vmem:[#allocation11 + $0x18] sm:$0xff]
    %v260 = vld [vmem:[#allocation11 + $0x20] sm:$0xff]
    %v261 = vld [vmem:[#allocation11 + $0x28] sm:$0xff]
    %v262 = vld [vmem:[#allocation11 + $0x30] sm:$0xff]
    %v263 = vld [vmem:[#allocation11 + $0x38] sm:$0xff]
    %v264 = vld [vmem:[#allocation11 + $0x40] sm:$0xff]
    %v265 = vld [vmem:[#allocation11 + $0x48] sm:$0xff]
    %v266 = vld [vmem:[#allocation11 + $0x50] sm:$0xff]
    %v267 = vld [vmem:[#allocation11 + $0x58] sm:$0xff]
    %v268 = vld [vmem:[#allocation11 + $0x60] sm:$0xff]
    %v269 = vld [vmem:[#allocation11 + $0x68] sm:$0xff]
    %v270 = vld [vmem:[#allocation11 + $0x70] sm:$0xff]
    %v271 = vld [vmem:[#allocation11 + $0x78] sm:$0xff]
    %v272 = vld [vmem:[#allocation11 + $0x80] sm:$0xff]
    %v273 = vld [vmem:[#allocation11 + $0x88] sm:$0xff]
    %v274 = vld [vmem:[#allocation11 + $0x90] sm:$0xff]
    %v275 = vld [vmem:[#allocation11 + $0x98] sm:$0xff]
    %v276 = vld [vmem:[#allocation11 + $0xa0] sm:$0xff]
    %v277 = vld [vmem:[#allocation11 + $0xa8] sm:$0xff]
    %v278 = vld [vmem:[#allocation11 + $0xb0] sm:$0xff]
    %v279 = vld [vmem:[#allocation11 + $0xb8] sm:$0xff]
    %v280 = vld [vmem:[#allocation11 + $0xc0] sm:$0xff]
    %v281 = vld [vmem:[#allocation11 + $0xc8] sm:$0xff]
    %v282 = vld [vmem:[#allocation11 + $0xd0] sm:$0xff]
    %v283 = vld [vmem:[#allocation11 + $0xd8] sm:$0xff]
    %v284 = vld [vmem:[#allocation11 + $0xe0] sm:$0xff]
    %v285 = vld [vmem:[#allocation11 + $0xe8] sm:$0xff]
    %v286 = vld [vmem:[#allocation11 + $0xf0] sm:$0xff]
    %v287 = vld [vmem:[#allocation11 + $0xf8] sm:$0xff]
    %v288 = vld [vmem:[#allocation2] sm:$0xff]
    %s289 = smul.u32 0, 2
    %s290 = smul.addr %s289, 8
    %s291 = scalar_lea.vmem [#allocation3], %s290
    %v292 = vld [vmem:[%s291] sm:$0xff]
    %v293 = vld [vmem:[%s291 + $0x8] sm:$0xff]
    %294 = vmatpush.msra.mxu0 %v286
    %295 = vmatpush.msra.mxu0 %v284
    %296 = vmatpush.msra.mxu0 %v282
    %297 = vmatpush.msra.mxu0 %v280
    %298 = vmatpush.msra.mxu0 %v278
    %299 = vmatpush.msra.mxu0 %v276
    %300 = vmatpush.msra.mxu0 %v274
    %301 = vmatpush.msra.mxu0 %v272
    %302 = vmatpush.msra.mxu0 %v270
    %303 = vmatpush.msra.mxu0 %v268
    %304 = vmatpush.msra.mxu0 %v266
    %305 = vmatpush.msra.mxu0 %v264
    %306 = vmatpush.msra.mxu0 %v262
    %307 = vmatpush.msra.mxu0 %v260
    %308 = vmatpush.msra.mxu0 %v258
    %309 = vmatpush.msra.mxu0 %v256
    %310 = vmatmul.f32.gmra.mxu0 %v288
    %v311 = vpop.f32.mrf.mxu0
    %v312 = vadd.f32 0.0, %v311
    %313 = vdwg.mxu0
    %314 = vmatpush.msra.mxu0 %v287
    %315 = vmatpush.msra.mxu0 %v285
    %316 = vmatpush.msra.mxu0 %v283
    %317 = vmatpush.msra.mxu0 %v281
    %318 = vmatpush.msra.mxu0 %v279
    %319 = vmatpush.msra.mxu0 %v277
    %320 = vmatpush.msra.mxu0 %v275
    %321 = vmatpush.msra.mxu0 %v273
    %322 = vmatpush.msra.mxu0 %v271
    %323 = vmatpush.msra.mxu0 %v269
    %324 = vmatpush.msra.mxu0 %v267
    %325 = vmatpush.msra.mxu0 %v265
    %326 = vmatpush.msra.mxu0 %v263
    %327 = vmatpush.msra.mxu0 %v261
    %328 = vmatpush.msra.mxu0 %v259
    %329 = vmatpush.msra.mxu0 %v257
    %330 = vmatmul.f32.gmra.mxu0 %v288
    %v331 = vpop.f32.mrf.mxu0
    %v332 = vadd.f32 0.0, %v331
    %333 = vdwg.mxu0
    %v334 = vadd.f32 %v292, %v312
    %v335 = vadd.f32 %v293, %v332
    %v336 = vmax.f32 %v334, 0.0
    %v337 = vmax.f32 %v335, 0.0
    %s338 = smul.addr %s289, 8
    %s339 = scalar_lea.vmem [#allocation4], %s338
    %340 = vst [vmem:[%s339] sm:$0xff] %v336
    %341 = vst [vmem:[%s339 + $0x8] sm:$0xff] %v337
    %s342 = smul.u32 0, 8
    %p343 = scmp.lt.s32.totalorder %s342, 8
    %s344 = scalar_select %p343, 1, 0
    %v345 = vstv %s344
    %vm346 = vcmp.eq.s32.totalorder %v345, 1
    %v347 = vsel %vm346, %v337, %v288
    %s348 = smul.u32 1, 2
    %s349 = smul.addr %s348, 8
    %s350 = scalar_lea.vmem [#allocation3], %s349
    %v351 = vld [vmem:[%s350] sm:$0xff]
    %v352 = vld [vmem:[%s350 + $0x8] sm:$0xff]
    %353 = vmatpush.msra.mxu0 %v286
    %354 = vmatpush.msra.mxu0 %v284
    %355 = vmatpush.msra.mxu0 %v282
    %356 = vmatpush.msra.mxu0 %v280
    %357 = vmatpush.msra.mxu0 %v278
    %358 = vmatpush.msra.mxu0 %v276
    %359 = vmatpush.msra.mxu0 %v274
    %360 = vmatpush.msra.mxu0 %v272
    %361 = vmatpush.msra.mxu0 %v270
    %362 = vmatpush.msra.mxu0 %v268
    %363 = vmatpush.msra.mxu0 %v266
    %364 = vmatpush.msra.mxu0 %v264
    %365 = vmatpush.msra.mxu0 %v262
    %366 = vmatpush.msra.mxu0 %v260
    %367 = vmatpush.msra.mxu0 %v258
    %368 = vmatpush.msra.mxu0 %v256
    %369 = vmatmul.f32.gmra.mxu0 %v347
    %v370 = vpop.f32.mrf.mxu0
    %v371 = vadd.f32 0.0, %v370
    %372 = vdwg.mxu0
    %373 = vmatpush.msra.mxu0 %v287
    %374 = vmatpush.msra.mxu0 %v285
    %375 = vmatpush.msra.mxu0 %v283
    %376 = vmatpush.msra.mxu0 %v281
    %377 = vmatpush.msra.mxu0 %v279
    %378 = vmatpush.msra.mxu0 %v277
    %379 = vmatpush.msra.mxu0 %v275
    %380 = vmatpush.msra.mxu0 %v273
    %381 = vmatpush.msra.mxu0 %v271
    %382 = vmatpush.msra.mxu0 %v269
    %383 = vmatpush.msra.mxu0 %v267
    %384 = vmatpush.msra.mxu0 %v265
    %385 = vmatpush.msra.mxu0 %v263
    %386 = vmatpush.msra.mxu0 %v261
    %387 = vmatpush.msra.mxu0 %v259
    %388 = vmatpush.msra.mxu0 %v257
    %389 = vmatmul.f32.gmra.mxu0 %v347
    %v390 = vpop.f32.mrf.mxu0
    %v391 = vadd.f32 0.0, %v390
    %392 = vdwg.mxu0
    %v393 = vadd.f32 %v351, %v371
    %v394 = vadd.f32 %v352, %v391
    %v395 = vmax.f32 %v393, 0.0
    %v396 = vmax.f32 %v394, 0.0
    %s397 = smul.addr %s348, 8
    %s398 = scalar_lea.vmem [#allocation4], %s397
    %399 = vst [vmem:[%s398] sm:$0xff] %v395
    %400 = vst [vmem:[%s398 + $0x8] sm:$0xff] %v396
    %s401 = sadd.s32 %s342, 1
    %p402 = scmp.lt.s32.totalorder %s401, 8
    %s403 = scalar_select %p402, 1, 0
    %v404 = vstv %s403
    %vm405 = vcmp.eq.s32.totalorder %v404, 1
    %v406 = vsel %vm405, %v396, %v347
    %s407 = smul.u32 2, 2
    %s408 = smul.addr %s407, 8
    %s409 = scalar_lea.vmem [#allocation3], %s408
    %v410 = vld [vmem:[%s409] sm:$0xff]
    %v411 = vld [vmem:[%s409 + $0x8] sm:$0xff]
    %412 = vmatpush.msra.mxu0 %v286
    %413 = vmatpush.msra.mxu0 %v284
    %414 = vmatpush.msra.mxu0 %v282
    %415 = vmatpush.msra.mxu0 %v280
    %416 = vmatpush.msra.mxu0 %v278
    %417 = vmatpush.msra.mxu0 %v276
    %418 = vmatpush.msra.mxu0 %v274
    %419 = vmatpush.msra.mxu0 %v272
    %420 = vmatpush.msra.mxu0 %v270
    %421 = vmatpush.msra.mxu0 %v268
    %422 = vmatpush.msra.mxu0 %v266
    %423 = vmatpush.msra.mxu0 %v264
    %424 = vmatpush.msra.mxu0 %v262
    %425 = vmatpush.msra.mxu0 %v260
    %426 = vmatpush.msra.mxu0 %v258
    %427 = vmatpush.msra.mxu0 %v256
    %428 = vmatmul.f32.gmra.mxu0 %v406
    %v429 = vpop.f32.mrf.mxu0
    %v430 = vadd.f32 0.0, %v429
    %431 = vdwg.mxu0
    %432 = vmatpush.msra.mxu0 %v287
    %433 = vmatpush.msra.mxu0 %v285
    %434 = vmatpush.msra.mxu0 %v283
    %435 = vmatpush.msra.mxu0 %v281
    %436 = vmatpush.msra.mxu0 %v279
    %437 = vmatpush.msra.mxu0 %v277
    %438 = vmatpush.msra.mxu0 %v275
    %439 = vmatpush.msra.mxu0 %v273
    %440 = vmatpush.msra.mxu0 %v271
    %441 = vmatpush.msra.mxu0 %v269
    %442 = vmatpush.msra.mxu0 %v267
    %443 = vmatpush.msra.mxu0 %v265
    %444 = vmatpush.msra.mxu0 %v263
    %445 = vmatpush.msra.mxu0 %v261
    %446 = vmatpush.msra.mxu0 %v259
    %447 = vmatpush.msra.mxu0 %v257
    %448 = vmatmul.f32.gmra.mxu0 %v406
    %v449 = vpop.f32.mrf.mxu0
    %v450 = vadd.f32 0.0, %v449
    %451 = vdwg.mxu0
    %v452 = vadd.f32 %v410, %v430
    %v453 = vadd.f32 %v411, %v450
    %v454 = vmax.f32 %v452, 0.0
    %v455 = vmax.f32 %v453, 0.0
    %s456 = smul.addr %s407, 8
    %s457 = scalar_lea.vmem [#allocation4], %s456
    %458 = vst [vmem:[%s457] sm:$0xff] %v454
    %459 = vst [vmem:[%s457 + $0x8] sm:$0xff] %v455
    %s460 = sadd.s32 %s342, 2
    %p461 = scmp.lt.s32.totalorder %s460, 8
    %s462 = scalar_select %p461, 1, 0
    %v463 = vstv %s462
    %vm464 = vcmp.eq.s32.totalorder %v463, 1
    %v465 = vsel %vm464, %v455, %v406
    %s466 = smul.u32 3, 2
    %s467 = smul.addr %s466, 8
    %s468 = scalar_lea.vmem [#allocation3], %s467
    %v469 = vld [vmem:[%s468] sm:$0xff]
    %v470 = vld [vmem:[%s468 + $0x8] sm:$0xff]
    %471 = vmatpush.msra.mxu0 %v286
    %472 = vmatpush.msra.mxu0 %v284
    %473 = vmatpush.msra.mxu0 %v282
    %474 = vmatpush.msra.mxu0 %v280
    %475 = vmatpush.msra.mxu0 %v278
    %476 = vmatpush.msra.mxu0 %v276
    %477 = vmatpush.msra.mxu0 %v274
    %478 = vmatpush.msra.mxu0 %v272
    %479 = vmatpush.msra.mxu0 %v270
    %480 = vmatpush.msra.mxu0 %v268
    %481 = vmatpush.msra.mxu0 %v266
    %482 = vmatpush.msra.mxu0 %v264
    %483 = vmatpush.msra.mxu0 %v262
    %484 = vmatpush.msra.mxu0 %v260
    %485 = vmatpush.msra.mxu0 %v258
    %486 = vmatpush.msra.mxu0 %v256
    %487 = vmatmul.f32.gmra.mxu0 %v465
    %v488 = vpop.f32.mrf.mxu0
    %v489 = vadd.f32 0.0, %v488
    %490 = vdwg.mxu0
    %491 = vmatpush.msra.mxu0 %v287
    %492 = vmatpush.msra.mxu0 %v285
    %493 = vmatpush.msra.mxu0 %v283
    %494 = vmatpush.msra.mxu0 %v281
    %495 = vmatpush.msra.mxu0 %v279
    %496 = vmatpush.msra.mxu0 %v277
    %497 = vmatpush.msra.mxu0 %v275
    %498 = vmatpush.msra.mxu0 %v273
    %499 = vmatpush.msra.mxu0 %v271
    %500 = vmatpush.msra.mxu0 %v269
    %501 = vmatpush.msra.mxu0 %v267
    %502 = vmatpush.msra.mxu0 %v265
    %503 = vmatpush.msra.mxu0 %v263
    %504 = vmatpush.msra.mxu0 %v261
    %505 = vmatpush.msra.mxu0 %v259
    %506 = vmatpush.msra.mxu0 %v257
    %507 = vmatmul.f32.gmra.mxu0 %v465
    %v508 = vpop.f32.mrf.mxu0
    %v509 = vadd.f32 0.0, %v508
    %510 = vdwg.mxu0
    %v511 = vadd.f32 %v469, %v489
    %v512 = vadd.f32 %v470, %v509
    %v513 = vmax.f32 %v511, 0.0
    %v514 = vmax.f32 %v512, 0.0
    %s515 = smul.addr %s466, 8
    %s516 = scalar_lea.vmem [#allocation4], %s515
    %517 = vst [vmem:[%s516] sm:$0xff] %v513
    %518 = vst [vmem:[%s516 + $0x8] sm:$0xff] %v514
    %s519 = sadd.s32 %s342, 3
    %p520 = scmp.lt.s32.totalorder %s519, 8
    %s521 = scalar_select %p520, 1, 0
    %v522 = vstv %s521
    %vm523 = vcmp.eq.s32.totalorder %v522, 1
    %v524 = vsel %vm523, %v514, %v465
    %s525 = smul.u32 4, 2
    %s526 = smul.addr %s525, 8
    %s527 = scalar_lea.vmem [#allocation3], %s526
    %v528 = vld [vmem:[%s527] sm:$0xff]
    %v529 = vld [vmem:[%s527 + $0x8] sm:$0xff]
    %530 = vmatpush.msra.mxu0 %v286
    %531 = vmatpush.msra.mxu0 %v284
    %532 = vmatpush.msra.mxu0 %v282
    %533 = vmatpush.msra.mxu0 %v280
    %534 = vmatpush.msra.mxu0 %v278
    %535 = vmatpush.msra.mxu0 %v276
    %536 = vmatpush.msra.mxu0 %v274
    %537 = vmatpush.msra.mxu0 %v272
    %538 = vmatpush.msra.mxu0 %v270
    %539 = vmatpush.msra.mxu0 %v268
    %540 = vmatpush.msra.mxu0 %v266
    %541 = vmatpush.msra.mxu0 %v264
    %542 = vmatpush.msra.mxu0 %v262
    %543 = vmatpush.msra.mxu0 %v260
    %544 = vmatpush.msra.mxu0 %v258
    %545 = vmatpush.msra.mxu0 %v256
    %546 = vmatmul.f32.gmra.mxu0 %v524
    %v547 = vpop.f32.mrf.mxu0
    %v548 = vadd.f32 0.0, %v547
    %549 = vdwg.mxu0
    %550 = vmatpush.msra.mxu0 %v287
    %551 = vmatpush.msra.mxu0 %v285
    %552 = vmatpush.msra.mxu0 %v283
    %553 = vmatpush.msra.mxu0 %v281
    %554 = vmatpush.msra.mxu0 %v279
    %555 = vmatpush.msra.mxu0 %v277
    %556 = vmatpush.msra.mxu0 %v275
    %557 = vmatpush.msra.mxu0 %v273
    %558 = vmatpush.msra.mxu0 %v271
    %559 = vmatpush.msra.mxu0 %v269
    %560 = vmatpush.msra.mxu0 %v267
    %561 = vmatpush.msra.mxu0 %v265
    %562 = vmatpush.msra.mxu0 %v263
    %563 = vmatpush.msra.mxu0 %v261
    %564 = vmatpush.msra.mxu0 %v259
    %565 = vmatpush.msra.mxu0 %v257
    %566 = vmatmul.f32.gmra.mxu0 %v524
    %v567 = vpop.f32.mrf.mxu0
    %v568 = vadd.f32 0.0, %v567
    %569 = vdwg.mxu0
    %v570 = vadd.f32 %v528, %v548
    %v571 = vadd.f32 %v529, %v568
    %v572 = vmax.f32 %v570, 0.0
    %v573 = vmax.f32 %v571, 0.0
    %s574 = smul.addr %s525, 8
    %s575 = scalar_lea.vmem [#allocation4], %s574
    %576 = vst [vmem:[%s575] sm:$0xff] %v572
    %577 = vst [vmem:[%s575 + $0x8] sm:$0xff] %v573
    %s578 = sadd.s32 %s342, 4
    %p579 = scmp.lt.s32.totalorder %s578, 8
    %s580 = scalar_select %p579, 1, 0
    %v581 = vstv %s580
    %vm582 = vcmp.eq.s32.totalorder %v581, 1
    %v583 = vsel %vm582, %v573, %v524
    %s584 = smul.u32 5, 2
    %s585 = smul.addr %s584, 8
    %s586 = scalar_lea.vmem [#allocation3], %s585
    %v587 = vld [vmem:[%s586] sm:$0xff]
    %v588 = vld [vmem:[%s586 + $0x8] sm:$0xff]
    %589 = vmatpush.msra.mxu0 %v286
    %590 = vmatpush.msra.mxu0 %v284
    %591 = vmatpush.msra.mxu0 %v282
    %592 = vmatpush.msra.mxu0 %v280
    %593 = vmatpush.msra.mxu0 %v278
    %594 = vmatpush.msra.mxu0 %v276
    %595 = vmatpush.msra.mxu0 %v274
    %596 = vmatpush.msra.mxu0 %v272
    %597 = vmatpush.msra.mxu0 %v270
    %598 = vmatpush.msra.mxu0 %v268
    %599 = vmatpush.msra.mxu0 %v266
    %600 = vmatpush.msra.mxu0 %v264
    %601 = vmatpush.msra.mxu0 %v262
    %602 = vmatpush.msra.mxu0 %v260
    %603 = vmatpush.msra.mxu0 %v258
    %604 = vmatpush.msra.mxu0 %v256
    %605 = vmatmul.f32.gmra.mxu0 %v583
    %v606 = vpop.f32.mrf.mxu0
    %v607 = vadd.f32 0.0, %v606
    %608 = vdwg.mxu0
    %609 = vmatpush.msra.mxu0 %v287
    %610 = vmatpush.msra.mxu0 %v285
    %611 = vmatpush.msra.mxu0 %v283
    %612 = vmatpush.msra.mxu0 %v281
    %613 = vmatpush.msra.mxu0 %v279
    %614 = vmatpush.msra.mxu0 %v277
    %615 = vmatpush.msra.mxu0 %v275
    %616 = vmatpush.msra.mxu0 %v273
    %617 = vmatpush.msra.mxu0 %v271
    %618 = vmatpush.msra.mxu0 %v269
    %619 = vmatpush.msra.mxu0 %v267
    %620 = vmatpush.msra.mxu0 %v265
    %621 = vmatpush.msra.mxu0 %v263
    %622 = vmatpush.msra.mxu0 %v261
    %623 = vmatpush.msra.mxu0 %v259
    %624 = vmatpush.msra.mxu0 %v257
    %625 = vmatmul.f32.gmra.mxu0 %v583
    %v626 = vpop.f32.mrf.mxu0
    %v627 = vadd.f32 0.0, %v626
    %628 = vdwg.mxu0
    %v629 = vadd.f32 %v587, %v607
    %v630 = vadd.f32 %v588, %v627
    %v631 = vmax.f32 %v629, 0.0
    %v632 = vmax.f32 %v630, 0.0
    %s633 = smul.addr %s584, 8
    %s634 = scalar_lea.vmem [#allocation4], %s633
    %635 = vst [vmem:[%s634] sm:$0xff] %v631
    %636 = vst [vmem:[%s634 + $0x8] sm:$0xff] %v632
    %s637 = sadd.s32 %s342, 5
    %p638 = scmp.lt.s32.totalorder %s637, 8
    %s639 = scalar_select %p638, 1, 0
    %v640 = vstv %s639
    %vm641 = vcmp.eq.s32.totalorder %v640, 1
    %v642 = vsel %vm641, %v632, %v583
    %s643 = smul.u32 6, 2
    %s644 = smul.addr %s643, 8
    %s645 = scalar_lea.vmem [#allocation3], %s644
    %v646 = vld [vmem:[%s645] sm:$0xff]
    %v647 = vld [vmem:[%s645 + $0x8] sm:$0xff]
    %648 = vmatpush.msra.mxu0 %v286
    %649 = vmatpush.msra.mxu0 %v284
    %650 = vmatpush.msra.mxu0 %v282
    %651 = vmatpush.msra.mxu0 %v280
    %652 = vmatpush.msra.mxu0 %v278
    %653 = vmatpush.msra.mxu0 %v276
    %654 = vmatpush.msra.mxu0 %v274
    %655 = vmatpush.msra.mxu0 %v272
    %656 = vmatpush.msra.mxu0 %v270
    %657 = vmatpush.msra.mxu0 %v268
    %658 = vmatpush.msra.mxu0 %v266
    %659 = vmatpush.msra.mxu0 %v264
    %660 = vmatpush.msra.mxu0 %v262
    %661 = vmatpush.msra.mxu0 %v260
    %662 = vmatpush.msra.mxu0 %v258
    %663 = vmatpush.msra.mxu0 %v256
    %664 = vmatmul.f32.gmra.mxu0 %v642
    %v665 = vpop.f32.mrf.mxu0
    %v666 = vadd.f32 0.0, %v665
    %667 = vdwg.mxu0
    %668 = vmatpush.msra.mxu0 %v287
    %669 = vmatpush.msra.mxu0 %v285
    %670 = vmatpush.msra.mxu0 %v283
    %671 = vmatpush.msra.mxu0 %v281
    %672 = vmatpush.msra.mxu0 %v279
    %673 = vmatpush.msra.mxu0 %v277
    %674 = vmatpush.msra.mxu0 %v275
    %675 = vmatpush.msra.mxu0 %v273
    %676 = vmatpush.msra.mxu0 %v271
    %677 = vmatpush.msra.mxu0 %v269
    %678 = vmatpush.msra.mxu0 %v267
    %679 = vmatpush.msra.mxu0 %v265
    %680 = vmatpush.msra.mxu0 %v263
    %681 = vmatpush.msra.mxu0 %v261
    %682 = vmatpush.msra.mxu0 %v259
    %683 = vmatpush.msra.mxu0 %v257
    %684 = vmatmul.f32.gmra.mxu0 %v642
    %v685 = vpop.f32.mrf.mxu0
    %v686 = vadd.f32 0.0, %v685
    %687 = vdwg.mxu0
    %v688 = vadd.f32 %v646, %v666
    %v689 = vadd.f32 %v647, %v686
    %v690 = vmax.f32 %v688, 0.0
    %v691 = vmax.f32 %v689, 0.0
    %s692 = smul.addr %s643, 8
    %s693 = scalar_lea.vmem [#allocation4], %s692
    %694 = vst [vmem:[%s693] sm:$0xff] %v690
    %695 = vst [vmem:[%s693 + $0x8] sm:$0xff] %v691
    %s696 = sadd.s32 %s342, 6
    %p697 = scmp.lt.s32.totalorder %s696, 8
    %s698 = scalar_select %p697, 1, 0
    %v699 = vstv %s698
    %vm700 = vcmp.eq.s32.totalorder %v699, 1
    %v701 = vsel %vm700, %v691, %v642
    %s702 = smul.u32 7, 2
    %s703 = smul.addr %s702, 8
    %s704 = scalar_lea.vmem [#allocation3], %s703
    %v705 = vld [vmem:[%s704] sm:$0xff]
    %v706 = vld [vmem:[%s704 + $0x8] sm:$0xff]
    %707 = vmatpush.msra.mxu0 %v286
    %708 = vmatpush.msra.mxu0 %v284
    %709 = vmatpush.msra.mxu0 %v282
    %710 = vmatpush.msra.mxu0 %v280
    %711 = vmatpush.msra.mxu0 %v278
    %712 = vmatpush.msra.mxu0 %v276
    %713 = vmatpush.msra.mxu0 %v274
    %714 = vmatpush.msra.mxu0 %v272
    %715 = vmatpush.msra.mxu0 %v270
    %716 = vmatpush.msra.mxu0 %v268
    %717 = vmatpush.msra.mxu0 %v266
    %718 = vmatpush.msra.mxu0 %v264
    %719 = vmatpush.msra.mxu0 %v262
    %720 = vmatpush.msra.mxu0 %v260
    %721 = vmatpush.msra.mxu0 %v258
    %722 = vmatpush.msra.mxu0 %v256
    %723 = vmatmul.f32.gmra.mxu0 %v701
    %v724 = vpop.f32.mrf.mxu0
    %v725 = vadd.f32 0.0, %v724
    %726 = vdwg.mxu0
    %727 = vmatpush.msra.mxu0 %v287
    %728 = vmatpush.msra.mxu0 %v285
    %729 = vmatpush.msra.mxu0 %v283
    %730 = vmatpush.msra.mxu0 %v281
    %731 = vmatpush.msra.mxu0 %v279
    %732 = vmatpush.msra.mxu0 %v277
    %733 = vmatpush.msra.mxu0 %v275
    %734 = vmatpush.msra.mxu0 %v273
    %735 = vmatpush.msra.mxu0 %v271
    %736 = vmatpush.msra.mxu0 %v269
    %737 = vmatpush.msra.mxu0 %v267
    %738 = vmatpush.msra.mxu0 %v265
    %739 = vmatpush.msra.mxu0 %v263
    %740 = vmatpush.msra.mxu0 %v261
    %741 = vmatpush.msra.mxu0 %v259
    %742 = vmatpush.msra.mxu0 %v257
    %743 = vmatmul.f32.gmra.mxu0 %v701
    %v744 = vpop.f32.mrf.mxu0
    %v745 = vadd.f32 0.0, %v744
    %746 = vdwg.mxu0
    %v747 = vadd.f32 %v705, %v725
    %v748 = vadd.f32 %v706, %v745
    %v749 = vmax.f32 %v747, 0.0
    %v750 = vmax.f32 %v748, 0.0
    %s751 = smul.addr %s702, 8
    %s752 = scalar_lea.vmem [#allocation4], %s751
    %753 = vst [vmem:[%s752] sm:$0xff] %v749
    %754 = vst [vmem:[%s752 + $0x8] sm:$0xff] %v750
    %s755 = sadd.s32 %s342, 7
    %p756 = scmp.lt.s32.totalorder %s755, 8
    %s757 = scalar_select %p756, 1, 0
    %v758 = vstv %s757
    %vm759 = vcmp.eq.s32.totalorder %v758, 1
    %v760 = vsel %vm759, %v750, %v701
    %761 = vst [vmem:[#allocation2] sm:$0xff] %v760
    %v762 = vld [vmem:[#allocation4] sm:$0xff]
    %v763 = vld [vmem:[#allocation4 + $0x8] sm:$0xff]
    %v764 = vld [vmem:[#allocation4 + $0x10] sm:$0xff]
    %v765 = vld [vmem:[#allocation4 + $0x18] sm:$0xff]
    %v766 = vld [vmem:[#allocation4 + $0x20] sm:$0xff]
    %v767 = vld [vmem:[#allocation4 + $0x28] sm:$0xff]
    %v768 = vld [vmem:[#allocation4 + $0x30] sm:$0xff]
    %v769 = vld [vmem:[#allocation4 + $0x38] sm:$0xff]
    %v770 = vld [vmem:[#allocation4 + $0x40] sm:$0xff]
    %v771 = vld [vmem:[#allocation4 + $0x48] sm:$0xff]
    %v772 = vld [vmem:[#allocation4 + $0x50] sm:$0xff]
    %v773 = vld [vmem:[#allocation4 + $0x58] sm:$0xff]
    %v774 = vld [vmem:[#allocation4 + $0x60] sm:$0xff]
    %v775 = vld [vmem:[#allocation4 + $0x68] sm:$0xff]
    %v776 = vld [vmem:[#allocation4 + $0x70] sm:$0xff]
    %v777 = vld [vmem:[#allocation4 + $0x78] sm:$0xff]
    %v778 = vld [vmem:[#allocation13] sm:$0xff]
    %v779 = vld [vmem:[#allocation13 + $0x8] sm:$0xff]
    %v780 = vld [vmem:[#allocation13 + $0x10] sm:$0xff]
    %v781 = vld [vmem:[#allocation13 + $0x18] sm:$0xff]
    %v782 = vld [vmem:[#allocation13 + $0x20] sm:$0xff]
    %v783 = vld [vmem:[#allocation13 + $0x28] sm:$0xff]
    %v784 = vld [vmem:[#allocation13 + $0x30] sm:$0xff]
    %v785 = vld [vmem:[#allocation13 + $0x38] sm:$0xff]
    %v786 = vld [vmem:[#allocation13 + $0x40] sm:$0xff]
    %v787 = vld [vmem:[#allocation13 + $0x48] sm:$0xff]
    %v788 = vld [vmem:[#allocation13 + $0x50] sm:$0xff]
    %v789 = vld [vmem:[#allocation13 + $0x58] sm:$0xff]
    %v790 = vld [vmem:[#allocation13 + $0x60] sm:$0xff]
    %v791 = vld [vmem:[#allocation13 + $0x68] sm:$0xff]
    %v792 = vld [vmem:[#allocation13 + $0x70] sm:$0xff]
    %v793 = vld [vmem:[#allocation13 + $0x78] sm:$0xff]
    %v794 = vld [vmem:[#allocation13 + $0x80] sm:$0xff]
    %v795 = vld [vmem:[#allocation13 + $0x88] sm:$0xff]
    %v796 = vld [vmem:[#allocation13 + $0x90] sm:$0xff]
    %v797 = vld [vmem:[#allocation13 + $0x98] sm:$0xff]
    %v798 = vld [vmem:[#allocation13 + $0xa0] sm:$0xff]
    %v799 = vld [vmem:[#allocation13 + $0xa8] sm:$0xff]
    %v800 = vld [vmem:[#allocation13 + $0xb0] sm:$0xff]
    %v801 = vld [vmem:[#allocation13 + $0xb8] sm:$0xff]
    %v802 = vld [vmem:[#allocation13 + $0xc0] sm:$0xff]
    %v803 = vld [vmem:[#allocation13 + $0xc8] sm:$0xff]
    %v804 = vld [vmem:[#allocation13 + $0xd0] sm:$0xff]
    %v805 = vld [vmem:[#allocation13 + $0xd8] sm:$0xff]
    %v806 = vld [vmem:[#allocation13 + $0xe0] sm:$0xff]
    %v807 = vld [vmem:[#allocation13 + $0xe8] sm:$0xff]
    %v808 = vld [vmem:[#allocation13 + $0xf0] sm:$0xff]
    %v809 = vld [vmem:[#allocation13 + $0xf8] sm:$0xff]
    %v810 = vld [vmem:[%s6] sm:$0x1]
    %v812 = vperm.slane %v810, 0
    %814 = vmatpush.msra.mxu0 %v793
    %815 = vmatpush.msra.mxu0 %v792
    %816 = vmatpush.msra.mxu0 %v791
    %817 = vmatpush.msra.mxu0 %v790
    %818 = vmatpush.msra.mxu0 %v789
    %819 = vmatpush.msra.mxu0 %v788
    %820 = vmatpush.msra.mxu0 %v787
    %821 = vmatpush.msra.mxu0 %v786
    %822 = vmatpush.msra.mxu0 %v785
    %823 = vmatpush.msra.mxu0 %v784
    %824 = vmatpush.msra.mxu0 %v783
    %825 = vmatpush.msra.mxu0 %v782
    %826 = vmatpush.msra.mxu0 %v781
    %827 = vmatpush.msra.mxu0 %v780
    %828 = vmatpush.msra.mxu0 %v779
    %829 = vmatpush.msra.mxu0 %v778
    %830 = vmatmul.f32.gmra.mxu0 %v762
    %v831 = vpop.f32.mrf.mxu0
    %v832 = vadd.f32 %v812, %v831
    %833 = vmatmul.f32.gmra.mxu0 %v764
    %v834 = vpop.f32.mrf.mxu0
    %v835 = vadd.f32 %v812, %v834
    %836 = vmatmul.f32.gmra.mxu0 %v766
    %v837 = vpop.f32.mrf.mxu0
    %v838 = vadd.f32 %v812, %v837
    %839 = vmatmul.f32.gmra.mxu0 %v768
    %v840 = vpop.f32.mrf.mxu0
    %v841 = vadd.f32 %v812, %v840
    %842 = vmatmul.f32.gmra.mxu0 %v770
    %v843 = vpop.f32.mrf.mxu0
    %v844 = vadd.f32 %v812, %v843
    %845 = vmatmul.f32.gmra.mxu0 %v772
    %v846 = vpop.f32.mrf.mxu0
    %v847 = vadd.f32 %v812, %v846
    %848 = vmatmul.f32.gmra.mxu0 %v774
    %v849 = vpop.f32.mrf.mxu0
    %v850 = vadd.f32 %v812, %v849
    %851 = vmatmul.f32.gmra.mxu0 %v776
    %v852 = vpop.f32.mrf.mxu0
    %v853 = vadd.f32 %v812, %v852
    %854 = vdwg.mxu0
    %855 = vmatpush.msra.mxu0 %v809
    %856 = vmatpush.msra.mxu0 %v808
    %857 = vmatpush.msra.mxu0 %v807
    %858 = vmatpush.msra.mxu0 %v806
    %859 = vmatpush.msra.mxu0 %v805
    %860 = vmatpush.msra.mxu0 %v804
    %861 = vmatpush.msra.mxu0 %v803
    %862 = vmatpush.msra.mxu0 %v802
    %863 = vmatpush.msra.mxu0 %v801
    %864 = vmatpush.msra.mxu0 %v800
    %865 = vmatpush.msra.mxu0 %v799
    %866 = vmatpush.msra.mxu0 %v798
    %867 = vmatpush.msra.mxu0 %v797
    %868 = vmatpush.msra.mxu0 %v796
    %869 = vmatpush.msra.mxu0 %v795
    %870 = vmatpush.msra.mxu0 %v794
    %871 = vmatmul.f32.gmra.mxu0 %v763
    %v872 = vpop.f32.mrf.mxu0
    %v873 = vadd.f32 %v832, %v872
    %874 = vmatmul.f32.gmra.mxu0 %v765
    %v875 = vpop.f32.mrf.mxu0
    %v876 = vadd.f32 %v835, %v875
    %877 = vmatmul.f32.gmra.mxu0 %v767
    %v878 = vpop.f32.mrf.mxu0
    %v879 = vadd.f32 %v838, %v878
    %880 = vmatmul.f32.gmra.mxu0 %v769
    %v881 = vpop.f32.mrf.mxu0
    %v882 = vadd.f32 %v841, %v881
    %883 = vmatmul.f32.gmra.mxu0 %v771
    %v884 = vpop.f32.mrf.mxu0
    %v885 = vadd.f32 %v844, %v884
    %886 = vmatmul.f32.gmra.mxu0 %v773
    %v887 = vpop.f32.mrf.mxu0
    %v888 = vadd.f32 %v847, %v887
    %889 = vmatmul.f32.gmra.mxu0 %v775
    %v890 = vpop.f32.mrf.mxu0
    %v891 = vadd.f32 %v850, %v890
    %892 = vmatmul.f32.gmra.mxu0 %v777
    %v893 = vpop.f32.mrf.mxu0
    %v894 = vadd.f32 %v853, %v893
    %895 = vdwg.mxu0
    %896 = vmax.xlane.f32.xlu0 %v873
    %v897 = vpop.xlane.xlu0 %896
    %898 = vmax.xlane.f32.xlu0 %v876
    %v899 = vpop.xlane.xlu0 %898
    %900 = vmax.xlane.f32.xlu0 %v879
    %v901 = vpop.xlane.xlu0 %900
    %902 = vmax.xlane.f32.xlu0 %v882
    %v903 = vpop.xlane.xlu0 %902
    %904 = vmax.xlane.f32.xlu0 %v885
    %v905 = vpop.xlane.xlu0 %904
    %906 = vmax.xlane.f32.xlu0 %v888
    %v907 = vpop.xlane.xlu0 %906
    %908 = vmax.xlane.f32.xlu0 %v891
    %v909 = vpop.xlane.xlu0 %908
    %910 = vmax.xlane.f32.xlu0 %v894
    %v911 = vpop.xlane.xlu0 %910
    %v912 = vsub.f32 %v873, %v897
    %v913 = vsub.f32 %v876, %v899
    %v914 = vsub.f32 %v879, %v901
    %v915 = vsub.f32 %v882, %v903
    %v916 = vsub.f32 %v885, %v905
    %v917 = vsub.f32 %v888, %v907
    %v918 = vsub.f32 %v891, %v909
    %v919 = vsub.f32 %v894, %v911
    %v920 = vmul.f32 %v912, 1.442695
    %v921 = vpow.pop %v920
    %v922 = vmul.f32 %v913, 1.442695
    %v923 = vpow.pop %v922
    %v924 = vmul.f32 %v914, 1.442695
    %v925 = vpow.pop %v924
    %v926 = vmul.f32 %v915, 1.442695
    %v927 = vpow.pop %v926
    %v928 = vmul.f32 %v916, 1.442695
    %v929 = vpow.pop %v928
    %v930 = vmul.f32 %v917, 1.442695
    %v931 = vpow.pop %v930
    %v932 = vmul.f32 %v918, 1.442695
    %v933 = vpow.pop %v932
    %v934 = vmul.f32 %v919, 1.442695
    %v935 = vpow.pop %v934
    %936 = vadd.xlane.f32.xlu0 %v921
    %v937 = vpop.xlane.xlu0 %936
    %938 = vadd.xlane.f32.xlu0 %v923
    %v939 = vpop.xlane.xlu0 %938
    %940 = vadd.xlane.f32.xlu0 %v925
    %v941 = vpop.xlane.xlu0 %940
    %942 = vadd.xlane.f32.xlu0 %v927
    %v943 = vpop.xlane.xlu0 %942
    %944 = vadd.xlane.f32.xlu0 %v929
    %v945 = vpop.xlane.xlu0 %944
    %946 = vadd.xlane.f32.xlu0 %v931
    %v947 = vpop.xlane.xlu0 %946
    %948 = vadd.xlane.f32.xlu0 %v933
    %v949 = vpop.xlane.xlu0 %948
    %950 = vadd.xlane.f32.xlu0 %v935
    %v951 = vpop.xlane.xlu0 %950
    %v952 = vlog2.pop %v937
    %v953 = vmul.f32 %v952, 0.6931472
    %v954 = vlog2.pop %v939
    %v955 = vmul.f32 %v954, 0.6931472
    %v956 = vlog2.pop %v941
    %v957 = vmul.f32 %v956, 0.6931472
    %v958 = vlog2.pop %v943
    %v959 = vmul.f32 %v958, 0.6931472
    %v960 = vlog2.pop %v945
    %v961 = vmul.f32 %v960, 0.6931472
    %v962 = vlog2.pop %v947
    %v963 = vmul.f32 %v962, 0.6931472
    %v964 = vlog2.pop %v949
    %v965 = vmul.f32 %v964, 0.6931472
    %v966 = vlog2.pop %v951
    %v967 = vmul.f32 %v966, 0.6931472
    %v968 = vadd.f32 %v897, %v953
    %v969 = vadd.f32 %v899, %v955
    %v970 = vadd.f32 %v901, %v957
    %v971 = vadd.f32 %v903, %v959
    %v972 = vadd.f32 %v905, %v961
    %v973 = vadd.f32 %v907, %v963
    %v974 = vadd.f32 %v909, %v965
    %v975 = vadd.f32 %v911, %v967
    %v976 = vsub.f32 %v873, %v968
    %v977 = vsub.f32 %v876, %v969
    %v978 = vsub.f32 %v879, %v970
    %v979 = vsub.f32 %v882, %v971
    %v980 = vsub.f32 %v885, %v972
    %v981 = vsub.f32 %v888, %v973
    %v982 = vsub.f32 %v891, %v974
    %v983 = vsub.f32 %v894, %v975
    %984 = vst [vmem:[#allocation14] sm:$0xff] %v976
    %985 = vst [vmem:[#allocation14 + $0x8] sm:$0xff] %v977
    %986 = vst [vmem:[#allocation14 + $0x10] sm:$0xff] %v978
    %987 = vst [vmem:[#allocation14 + $0x18] sm:$0xff] %v979
    %988 = vst [vmem:[#allocation14 + $0x20] sm:$0xff] %v980
    %989 = vst [vmem:[#allocation14 + $0x28] sm:$0xff] %v981
    %990 = vst [vmem:[#allocation14 + $0x30] sm:$0xff] %v982
    %991 = vst [vmem:[#allocation14 + $0x38] sm:$0xff] %v983
    // Predicated region
    $region54: #{tpu_custom_call.1} parent=1 // pred_check
      %p992 = pneg %p106
    $region55: #{tpu_custom_call.1} parent=1 // pred_check_branch
      %994 = sbr.rel (%p992) target = $region57
    $region56: #{tpu_custom_call.1} parent=1 // pred_region
      %995 = vst [vmem:[#allocation15] sm:$0xff] %v760
    $region57: #{tpu_custom_call.1} parent=1 // pred_fallthru
      _
    // Predicated region
    $region58: #{tpu_custom_call.1} parent=1 // pred_check
      _
    $region59: #{tpu_custom_call.1} parent=1 // pred_check_branch
      %997 = sbr.rel (0) target = $region61
    $region60: #{tpu_custom_call.1} parent=1 // pred_region
      %999 = vsyncadd [#allocation7], 0
      %s1000 = sshll.u32 [#allocation14], 4
      %s1001 = int_to_ptr.vmem [resolvable:$true] %s1000
      %s1002 = sshll.u32 %s7, 4
      %s1003 = int_to_ptr.hbm [resolvable:$true] %s1002
      %1008 = dma.vmem_to_hbm [thread:$0]  %s1001, 1024, %s1003, [#allocation7], 128, 128, 8
    $region61: #{tpu_custom_call.1} parent=1 // pred_fallthru
      _
    // Predicated region
    $region62: #{tpu_custom_call.1} parent=1 // pred_check
      _
    $region63: #{tpu_custom_call.1} parent=1 // pred_check_branch
      %1010 = sbr.rel (0) target = $region65
    $region64: #{tpu_custom_call.1} parent=1 // pred_region
      %1012 = vsyncadd [#allocation16], 0
      %s1014 = sshll.u32 [#allocation15], 4
      %s1015 = int_to_ptr.vmem [resolvable:$true] %s1014
      %s1016 = sshll.u32 %s8, 4
      %s1017 = int_to_ptr.hbm [resolvable:$true] %s1016
      %1019 = dma.vmem_to_hbm [thread:$0]  %s1015, 128, %s1017, [#allocation16]
    $region65: #{tpu_custom_call.1} parent=1 // pred_fallthru
      _
    // Predicated region
    $region66: #{tpu_custom_call.1} parent=1 // pred_check
      _
    $region67: #{tpu_custom_call.1} parent=1 // pred_check_branch
      %1021 = sbr.rel (0) target = $region69
    $region68: #{tpu_custom_call.1} parent=1 // pred_region
      %1023 = dma.done [#allocation7], 1024
    $region69: #{tpu_custom_call.1} parent=1 // pred_fallthru
      _
    // Predicated region
    $region70: #{tpu_custom_call.1} parent=1 // pred_check
      _
    $region71: #{tpu_custom_call.1} parent=1 // pred_check_branch
      %1025 = sbr.rel (0) target = $region73
    $region72: #{tpu_custom_call.1} parent=1 // pred_region
      %1027 = dma.done [#allocation16], 128
    $region73: #{tpu_custom_call.1} parent=1 // pred_fallthru
      _
    %1028 = vsyncpa [#allocation6], 1
    %1029 = vsyncpa [#allocation9], 1
    %1030 = vsyncpa [#allocation12], 1
    %1031 = vsyncpa [#allocation7], 1
    %1032 = vsyncpa [#allocation16], 1

</llo_original>
